<compile_context>
chip_gen: v7x
topology: tpu7x:2x2x1
jax: 0.10.0
libtpu: 0.0.40
codegen_flags: <defaults>
</compile_context>

<pallas_src>
import functools

import jax
import jax.numpy as jnp
from jax.experimental import pallas as pl
from jax.experimental.pallas import tpu as pltpu

BN_EPS = 1e-4     # norm_fn = BatchNorm1d(eps=0.0001)
NORM_EPS = 1e-12  # F.normalize default eps
_W_LANES = 32     # lane width of the packed weight slab (>= max cin, mult of 8)


def _round_up(x, m):
    return ((x + m - 1) // m) * m


# ----------------------------------------------------------------------------
# Fused forward kernel (whole network in one pallas_call, channel-major)
# ----------------------------------------------------------------------------
def _make_fused_kernel(unet_planes, n_real, w_metas, n_head_layers, r_dim, d_dim):
    unet_planes = tuple(unet_planes)
    inv_n = 1.0 / float(n_real)   # baked at trace time (static shapes under jit)

    def kernel(x_ref, w_ref, o_ref):
        n_lanes = x_ref.shape[1]      # padded point count (multiple of 128)
        out_rows = o_ref.shape[0]

        # lane mask for real points (generated in-kernel, no DMA'd mask array)
        lane_idx = jax.lax.broadcasted_iota(jnp.int32, (1, n_lanes), 1)
        lane_mask = (lane_idx < n_real).astype(jnp.float32)       # [1, Np]

        widx = [0]

        def next_w():
            r0, cout, cin = w_metas[widx[0]]
            widx[0] += 1
            return w_ref[r0:r0 + cout, :cin]        # static slice of the slab

        def matmul(wt, a):
            # W^T @ X : [cout, cin] @ [cin, Np] -> [cout, Np] (lane-dense)
            return jnp.dot(wt, a, preferred_element_type=jnp.float32)

        def bn(y, *, relu):
            # Single-pass BatchNorm1d batch stats (gamma=1, beta=0, eps=1e-4).
            # Padded lanes never pollute the statistics (lane_mask).
            ym = y * lane_mask
            s1 = jnp.sum(ym, axis=1, keepdims=True)               # [C, 1]
            s2 = jnp.sum(ym * y, axis=1, keepdims=True)           # [C, 1]
            mean = s1 * inv_n
            var = jnp.maximum(s2 * inv_n - mean * mean, 0.0)
            out = (y - mean) * jax.lax.rsqrt(var + BN_EPS)
            if relu:
                out = jnp.maximum(out, 0.0)
            return out

        def linear_bn(a, *, relu):
            return bn(matmul(next_w(), a), relu=relu)

        # ---- input_conv: SubMConv(k=1) -> BN -> ReLU ------------------------
        x = linear_bn(x_ref[...], relu=True)

        # ---- UBlock (recursive) ---------------------------------------------
        def ublock(x, planes):
            # encoder residual block (identity skip); add+ReLU fused epilogue
            h = linear_bn(x, relu=True)              # enc1
            h = linear_bn(h, relu=False)             # enc2
            x = jnp.maximum(h + x, 0.0)
            if len(planes) > 1:
                skip = x
                d = linear_bn(x, relu=True)          # down: c -> planes[1]
                d = ublock(d, planes[1:])            # inner UBlock
                u = linear_bn(d, relu=True)          # up:   planes[1] -> c
                # decoder residual block on cat([skip, u]); in channel-major
                # the concat is a cheap sublane stack, one K=2c matmul each.
                cat = jnp.concatenate([skip, u], axis=0)          # [2c, Np]
                identity = bn(matmul(next_w(), cat), relu=False)  # dec_skip
                h = bn(matmul(next_w(), cat), relu=True)          # dec1
                h = linear_bn(h, relu=False)                      # dec2
                x = jnp.maximum(h + identity, 0.0)
            return x

        x = ublock(x, unet_planes)

        # ---- merged heads -----------------------------------------------------
        # radius/direction/class SparseFCs share the input; layer-0 weights are
        # hstacked, deeper layers are block-diagonal, so the heads cost one
        # matmul per layer and the output rows already come out concatenated as
        # [radius | direction | class | zero-pad].
        for li in range(n_head_layers):
            last = li == n_head_layers - 1
            y = matmul(next_w(), x)
            x = y if last else bn(y, relu=True)

        assert widx[0] == len(w_metas), (widx[0], len(w_metas))  # trace-time

        # ---- epilogue: F.normalize(direction) via row mask + rsqrt -----------
        row_idx = jax.lax.broadcasted_iota(jnp.int32, (out_rows, n_lanes), 0)
        dir_mask = ((row_idx >= r_dim) &
                    (row_idx < r_dim + d_dim)).astype(jnp.float32)
        sumsq = jnp.sum(x * x * dir_mask, axis=0, keepdims=True)  # [1, Np]
        inv_norm = jax.lax.rsqrt(jnp.maximum(sumsq, NORM_EPS * NORM_EPS))
        scale = dir_mask * inv_norm + (1.0 - dir_mask)
        o_ref[...] = x * scale                       # single lane-dense store

    return kernel


# ----------------------------------------------------------------------------
# Weight flattening / head merging / slab packing (wrapper-side, traced)
# ----------------------------------------------------------------------------
def _flatten_ublock(p, planes):
    ws = [p["enc1"], p["enc2"]]
    if len(planes) > 1:
        ws.append(p["down"])
        ws += _flatten_ublock(p["inner"], planes[1:])
        ws.append(p["up"])
        ws += [p["dec_skip"], p["dec1"], p["dec2"]]
    return ws


def _block_diag(blocks):
    total_cols = sum(b.shape[1] for b in blocks)
    rows, c0 = [], 0
    for b in blocks:
        rows.append(jnp.pad(b, ((0, 0), (c0, total_cols - c0 - b.shape[1]))))
        c0 += b.shape[1]
    return jnp.concatenate(rows, axis=0)


def _merge_heads(head_weight_lists, out_pad):
    depth = len(head_weight_lists[0])
    assert all(len(ws) == depth for ws in head_weight_lists), \
        "head merging assumes equal-depth SparseFC heads"
    merged = [jnp.concatenate([ws[0] for ws in head_weight_lists], axis=1)]
    for li in range(1, depth):
        merged.append(_block_diag([ws[li] for ws in head_weight_lists]))
    last = merged[-1]
    if last.shape[1] < out_pad:                      # pad the output channels
        merged[-1] = jnp.pad(last, ((0, 0), (0, out_pad - last.shape[1])))
    return merged


def _pack_weights(w_list):
    """Transpose every [cin, cout] weight to [cout, cin], pad and stack all of
    them into one [rows, lane_w] slab.  Returns (slab, ((row0, cout, cin),...))."""
    lane_w = max(_W_LANES, _round_up(max(w.shape[0] for w in w_list), 8))
    metas, blocks, r0 = [], [], 0
    for w in w_list:
        cin, cout = w.shape
        wt = w.T                                             # [cout, cin]
        cout_pad = _round_up(cout, 8)
        wt = jnp.pad(wt, ((0, cout_pad - cout), (0, lane_w - cin)))
        metas.append((r0, cout, cin))
        blocks.append(wt)
        r0 += cout_pad
    return jnp.concatenate(blocks, axis=0), tuple(metas)


def _vmem_limit_bytes():
    """Per-generation scoped-VMEM budget (leave ~25% headroom)."""
    try:
        info = pltpu.get_tpu_info()
        cap = getattr(info, "vmem_capacity_bytes", None)
        if cap:
            return int(cap) * 3 // 4        # ~96 MiB v5e/v6e, ~48 MiB v7x
    except Exception:
        pass
    return 32 * 1024 * 1024                 # conservative fallback


# ----------------------------------------------------------------------------
# Forward pass (single pallas_call)
# ----------------------------------------------------------------------------
def smart_tree_forward(features, params, unet_planes):
    n, cin = features.shape
    n_pad = _round_up(n, 128)               # points -> lane axis
    cin_pad = _round_up(cin, 8)             # channels -> sublane axis

    r_dim = params["radius_head"][-1].shape[1]
    d_dim = params["direction_head"][-1].shape[1]
    c_dim = params["class_head"][-1].shape[1]
    out_dim = r_dim + d_dim + c_dim
    out_pad = _round_up(out_dim, 8)

    # channel-major activation slab: [C, Np] (lane-dense)
    feat = jnp.pad(features.T, ((0, cin_pad - cin), (0, n_pad - n)))

    # input_conv weight padded to the padded input channel count (zero rows)
    w_in = jnp.pad(params["input_conv"], ((0, cin_pad - cin), (0, 0)))
    weights = [w_in]
    weights += _flatten_ublock(params["unet"], list(unet_planes))
    merged_heads = _merge_heads(
        [params["radius_head"], params["direction_head"], params["class_head"]],
        out_pad)
    weights += merged_heads

    w_slab, w_metas = _pack_weights(weights)

    kernel = _make_fused_kernel(unet_planes, n, w_metas, len(merged_heads),
                                r_dim, d_dim)

    out = pl.pallas_call(
        kernel,
        out_shape=jax.ShapeDtypeStruct((out_pad, n_pad), jnp.float32),
        grid=(1,),
        in_specs=[pl.BlockSpec(feat.shape, lambda i: (0, 0)),
                  pl.BlockSpec(w_slab.shape, lambda i: (0, 0))],
        out_specs=pl.BlockSpec((out_pad, n_pad), lambda i: (0, 0)),
        compiler_params=pltpu.CompilerParams(
            dimension_semantics=("arbitrary",),
            vmem_limit_bytes=_vmem_limit_bytes(),
        ),
    )(feat, w_slab)
    return out[:out_dim, :n].T               # back to [N, 1+3+num_classes]


# ----------------------------------------------------------------------------
# Deterministic parameter init (bias=False everywhere, BN gamma=1 / beta=0)
# ----------------------------------------------------------------------------
def _make_w(key, cin, cout):
    return jax.random.normal(key, (cin, cout), jnp.float32) * jnp.sqrt(2.0 / cin)


def _init_ublock(key, planes):
    ks = jax.random.split(key, 8)
    c = planes[0]
    p = {"enc1": _make_w(ks[0], c, c), "enc2": _make_w(ks[1], c, c)}
    if len(planes) > 1:
        p["down"] = _make_w(ks[2], c, planes[1])
        p["inner"] = _init_ublock(ks[3], planes[1:])
        p["up"] = _make_w(ks[4], planes[1], c)
        p["dec_skip"] = _make_w(ks[5], 2 * c, c)
        p["dec1"] = _make_w(ks[6], 2 * c, c)
        p["dec2"] = _make_w(ks[7], c, c)
    return p


def _init_fc(key, planes):
    ks = jax.random.split(key, len(planes) - 1)
    return [_make_w(k, ci, co) for k, ci, co in zip(ks, planes[:-1], planes[1:])]


def init_params(key, input_channels, unet_planes,
                radius_planes, direction_planes, class_planes):
    k0, k1, k2, k3, k4 = jax.random.split(key, 5)
    return {
        "input_conv": _make_w(k0, input_channels, unet_planes[0]),
        "unet": _init_ublock(k1, list(unet_planes)),
        "radius_head": _init_fc(k2, list(radius_planes)),
        "direction_head": _init_fc(k3, list(direction_planes)),
        "class_head": _init_fc(k4, list(class_planes)),
    }


# ----------------------------------------------------------------------------
# Pure-JAX reference (mirrors the per-layer PyTorch structure) for validation
# ----------------------------------------------------------------------------
def _ref_linear(x, w, *, bn, relu):
    y = x @ w
    if bn:
        mean = jnp.mean(y, axis=0, keepdims=True)
        var = jnp.mean((y - mean) ** 2, axis=0, keepdims=True)
        y = (y - mean) * jax.lax.rsqrt(var + BN_EPS)
    if relu:
        y = jnp.maximum(y, 0.0)
    return y


def _ref_residual(x, w1, w2, w_skip=None):
    identity = x if w_skip is None else _ref_linear(x, w_skip, bn=True, relu=False)
    out = _ref_linear(x, w1, bn=True, relu=True)
    out = _ref_linear(out, w2, bn=True, relu=False)
    return jnp.maximum(out + identity, 0.0)


def _ref_ublock(x, planes, p):
    x = _ref_residual(x, p["enc1"], p["enc2"])
    if len(planes) > 1:
        skip = x
        d = _ref_linear(x, p["down"], bn=True, relu=True)
        d = _ref_ublock(d, planes[1:], p["inner"])
        u = _ref_linear(d, p["up"], bn=True, relu=True)
        cat = jnp.concatenate([skip, u], axis=1)
        x = _ref_residual(cat, p["dec1"], p["dec2"], p["dec_skip"])
    return x


def _ref_fc(x, ws):
    for i, w in enumerate(ws):
        last = i == len(ws) - 1
        x = _ref_linear(x, w, bn=not last, relu=not last)
    return x


def smart_tree_reference(features, params, unet_planes):
    x = _ref_linear(features, params["input_conv"], bn=True, relu=True)
    u = _ref_ublock(x, list(unet_planes), params["unet"])
    r = _ref_fc(u, params["radius_head"])
    d = _ref_fc(u, params["direction_head"])
    c = _ref_fc(u, params["class_head"])
    dn = d / jnp.maximum(jnp.sqrt(jnp.sum(d * d, axis=1, keepdims=True)), NORM_EPS)
    return jnp.concatenate([r, dn, c], axis=1)


# ----------------------------------------------------------------------------
if __name__ == "__main__":
    # small configuration consistent with the module's __init__
    N = 64                       # number of active sparse voxels / points
    input_channels = 4
    unet_planes = (8, 16)
    radius_fc_planes = (8, 8, 1)
    direction_fc_planes = (8, 8, 3)
    class_fc_planes = (8, 8, 2)

    key = jax.random.PRNGKey(0)
    k_feat, k_params = jax.random.split(key)
    features = jax.random.normal(k_feat, (N, input_channels), jnp.float32)

    params = init_params(k_params, input_channels, unet_planes,
                         radius_fc_planes, direction_fc_planes, class_fc_planes)

    fwd = jax.jit(functools.partial(smart_tree_forward, unet_planes=unet_planes))
    out = jax.block_until_ready(fwd(features, params))

    expected_cols = (radius_fc_planes[-1] + direction_fc_planes[-1]
                     + class_fc_planes[-1])
    assert out.shape == (N, expected_cols), out.shape
    assert out.dtype == jnp.float32
    assert bool(jnp.all(jnp.isfinite(out)))

    ref = smart_tree_reference(features, params, unet_planes)
    assert bool(jnp.allclose(out, ref, atol=2e-3, rtol=2e-3)), \
        float(jnp.max(jnp.abs(out - ref)))

    print("KERNEL_OK")
</pallas_src>

<mosaic_0001>
module attributes {stable_mosaic.version = 11 : i64} {
  func.func @kernel(%arg0: i32, %arg1: memref<8x128xf32, #tpu.memory_space<vmem>>, %arg2: memref<136x32xf32, #tpu.memory_space<vmem>>, %arg3: memref<8x128xf32, #tpu.memory_space<vmem>>) attributes {dimension_semantics = [#tpu.dimension_semantics<arbitrary>], iteration_bounds = array<i64: 1>, scalar_prefetch = 0 : i64, scratch_operands = 0 : i64, tpu.core_type = #tpu.core_type<tc>, window_params = [{pipeline_mode = #tpu.pipeline_mode<synchronous>, transform_indices = @transform_0, window_bounds = array<i64: 8, 128>}, {pipeline_mode = #tpu.pipeline_mode<synchronous>, transform_indices = @transform_1, window_bounds = array<i64: 136, 32>}, {pipeline_mode = #tpu.pipeline_mode<synchronous>, transform_indices = @transform_2, window_bounds = array<i64: 8, 128>}]} {
    %0 = tpu.iota {dimensions = array<i32: 1>} : vector<1x128xi32>
    %c64_i32 = arith.constant 64 : i32
    %1 = vector.broadcast %c64_i32 : i32 to vector<1x128xi32>
    %2 = arith.cmpi slt, %0, %1 : vector<1x128xi32>
    %3 = arith.extui %2 : vector<1x128xi1> to vector<1x128xi32>
    %4 = arith.sitofp %3 : vector<1x128xi32> to vector<1x128xf32>
    %c0 = arith.constant 0 : index
    %c0_0 = arith.constant 0 : index
    %5 = vector.load %arg1[%c0, %c0_0] : memref<8x128xf32, #tpu.memory_space<vmem>>, vector<8x128xf32>
    %c0_1 = arith.constant 0 : index
    %c0_2 = arith.constant 0 : index
    %6 = vector.load %arg2[%c0_1, %c0_2] : memref<136x32xf32, #tpu.memory_space<vmem>>, vector<8x8xf32>
    %cst = arith.constant dense<0.000000e+00> : vector<8x128xf32>
    %7 = tpu.matmul %6, %5, %cst {dimension_numbers = #tpu.dot_dimension_numbers<[1], [0], [0], [1], [0, 0, 1, 1], [], []>} : vector<8x8xf32>, vector<8x128xf32>, vector<8x128xf32> -> vector<8x128xf32>
    %8 = vector.broadcast %4 : vector<1x128xf32> to vector<8x128xf32>
    %9 = arith.mulf %7, %8 : vector<8x128xf32>
    %cst_3 = arith.constant dense<0.000000e+00> : vector<8xf32>
    %10 = vector.multi_reduction <add>, %9, %cst_3 [1] : vector<8x128xf32> to vector<8xf32>
    %11 = vector.shape_cast %10 : vector<8xf32> to vector<8x1xf32>
    %12 = arith.mulf %9, %7 : vector<8x128xf32>
    %cst_4 = arith.constant dense<0.000000e+00> : vector<8xf32>
    %13 = vector.multi_reduction <add>, %12, %cst_4 [1] : vector<8x128xf32> to vector<8xf32>
    %14 = vector.shape_cast %13 : vector<8xf32> to vector<8x1xf32>
    %cst_5 = arith.constant 1.562500e-02 : f32
    %15 = vector.broadcast %cst_5 : f32 to vector<8x1xf32>
    %16 = arith.mulf %11, %15 : vector<8x1xf32>
    %cst_6 = arith.constant 1.562500e-02 : f32
    %17 = vector.broadcast %cst_6 : f32 to vector<8x1xf32>
    %18 = arith.mulf %14, %17 : vector<8x1xf32>
    %19 = arith.mulf %16, %16 : vector<8x1xf32>
    %20 = arith.subf %18, %19 : vector<8x1xf32>
    %cst_7 = arith.constant 0.000000e+00 : f32
    %21 = vector.broadcast %cst_7 : f32 to vector<8x1xf32>
    %22 = arith.maximumf %20, %21 : vector<8x1xf32>
    %23 = vector.broadcast %16 : vector<8x1xf32> to vector<8x128xf32>
    %24 = arith.subf %7, %23 : vector<8x128xf32>
    %cst_8 = arith.constant 9.99999974E-5 : f32
    %25 = vector.broadcast %cst_8 : f32 to vector<8x1xf32>
    %26 = arith.addf %22, %25 : vector<8x1xf32>
    %27 = math.rsqrt %26 : vector<8x1xf32>
    %28 = vector.broadcast %27 : vector<8x1xf32> to vector<8x128xf32>
    %29 = arith.mulf %24, %28 : vector<8x128xf32>
    %cst_9 = arith.constant 0.000000e+00 : f32
    %30 = vector.broadcast %cst_9 : f32 to vector<8x128xf32>
    %31 = arith.maximumf %29, %30 : vector<8x128xf32>
    %c8 = arith.constant 8 : index
    %c0_10 = arith.constant 0 : index
    %32 = vector.load %arg2[%c8, %c0_10] : memref<136x32xf32, #tpu.memory_space<vmem>>, vector<8x8xf32>
    %cst_11 = arith.constant dense<0.000000e+00> : vector<8x128xf32>
    %33 = tpu.matmul %32, %31, %cst_11 {dimension_numbers = #tpu.dot_dimension_numbers<[1], [0], [0], [1], [0, 0, 1, 1], [], []>} : vector<8x8xf32>, vector<8x128xf32>, vector<8x128xf32> -> vector<8x128xf32>
    %34 = vector.broadcast %4 : vector<1x128xf32> to vector<8x128xf32>
    %35 = arith.mulf %33, %34 : vector<8x128xf32>
    %cst_12 = arith.constant dense<0.000000e+00> : vector<8xf32>
    %36 = vector.multi_reduction <add>, %35, %cst_12 [1] : vector<8x128xf32> to vector<8xf32>
    %37 = vector.shape_cast %36 : vector<8xf32> to vector<8x1xf32>
    %38 = arith.mulf %35, %33 : vector<8x128xf32>
    %cst_13 = arith.constant dense<0.000000e+00> : vector<8xf32>
    %39 = vector.multi_reduction <add>, %38, %cst_13 [1] : vector<8x128xf32> to vector<8xf32>
    %40 = vector.shape_cast %39 : vector<8xf32> to vector<8x1xf32>
    %cst_14 = arith.constant 1.562500e-02 : f32
    %41 = vector.broadcast %cst_14 : f32 to vector<8x1xf32>
    %42 = arith.mulf %37, %41 : vector<8x1xf32>
    %cst_15 = arith.constant 1.562500e-02 : f32
    %43 = vector.broadcast %cst_15 : f32 to vector<8x1xf32>
    %44 = arith.mulf %40, %43 : vector<8x1xf32>
    %45 = arith.mulf %42, %42 : vector<8x1xf32>
    %46 = arith.subf %44, %45 : vector<8x1xf32>
    %cst_16 = arith.constant 0.000000e+00 : f32
    %47 = vector.broadcast %cst_16 : f32 to vector<8x1xf32>
    %48 = arith.maximumf %46, %47 : vector<8x1xf32>
    %49 = vector.broadcast %42 : vector<8x1xf32> to vector<8x128xf32>
    %50 = arith.subf %33, %49 : vector<8x128xf32>
    %cst_17 = arith.constant 9.99999974E-5 : f32
    %51 = vector.broadcast %cst_17 : f32 to vector<8x1xf32>
    %52 = arith.addf %48, %51 : vector<8x1xf32>
    %53 = math.rsqrt %52 : vector<8x1xf32>
    %54 = vector.broadcast %53 : vector<8x1xf32> to vector<8x128xf32>
    %55 = arith.mulf %50, %54 : vector<8x128xf32>
    %cst_18 = arith.constant 0.000000e+00 : f32
    %56 = vector.broadcast %cst_18 : f32 to vector<8x128xf32>
    %57 = arith.maximumf %55, %56 : vector<8x128xf32>
    %c16 = arith.constant 16 : index
    %c0_19 = arith.constant 0 : index
    %58 = vector.load %arg2[%c16, %c0_19] : memref<136x32xf32, #tpu.memory_space<vmem>>, vector<8x8xf32>
    %cst_20 = arith.constant dense<0.000000e+00> : vector<8x128xf32>
    %59 = tpu.matmul %58, %57, %cst_20 {dimension_numbers = #tpu.dot_dimension_numbers<[1], [0], [0], [1], [0, 0, 1, 1], [], []>} : vector<8x8xf32>, vector<8x128xf32>, vector<8x128xf32> -> vector<8x128xf32>
    %60 = vector.broadcast %4 : vector<1x128xf32> to vector<8x128xf32>
    %61 = arith.mulf %59, %60 : vector<8x128xf32>
    %cst_21 = arith.constant dense<0.000000e+00> : vector<8xf32>
    %62 = vector.multi_reduction <add>, %61, %cst_21 [1] : vector<8x128xf32> to vector<8xf32>
    %63 = vector.shape_cast %62 : vector<8xf32> to vector<8x1xf32>
    %64 = arith.mulf %61, %59 : vector<8x128xf32>
    %cst_22 = arith.constant dense<0.000000e+00> : vector<8xf32>
    %65 = vector.multi_reduction <add>, %64, %cst_22 [1] : vector<8x128xf32> to vector<8xf32>
    %66 = vector.shape_cast %65 : vector<8xf32> to vector<8x1xf32>
    %cst_23 = arith.constant 1.562500e-02 : f32
    %67 = vector.broadcast %cst_23 : f32 to vector<8x1xf32>
    %68 = arith.mulf %63, %67 : vector<8x1xf32>
    %cst_24 = arith.constant 1.562500e-02 : f32
    %69 = vector.broadcast %cst_24 : f32 to vector<8x1xf32>
    %70 = arith.mulf %66, %69 : vector<8x1xf32>
    %71 = arith.mulf %68, %68 : vector<8x1xf32>
    %72 = arith.subf %70, %71 : vector<8x1xf32>
    %cst_25 = arith.constant 0.000000e+00 : f32
    %73 = vector.broadcast %cst_25 : f32 to vector<8x1xf32>
    %74 = arith.maximumf %72, %73 : vector<8x1xf32>
    %75 = vector.broadcast %68 : vector<8x1xf32> to vector<8x128xf32>
    %76 = arith.subf %59, %75 : vector<8x128xf32>
    %cst_26 = arith.constant 9.99999974E-5 : f32
    %77 = vector.broadcast %cst_26 : f32 to vector<8x1xf32>
    %78 = arith.addf %74, %77 : vector<8x1xf32>
    %79 = math.rsqrt %78 : vector<8x1xf32>
    %80 = vector.broadcast %79 : vector<8x1xf32> to vector<8x128xf32>
    %81 = arith.mulf %76, %80 : vector<8x128xf32>
    %82 = arith.addf %81, %31 : vector<8x128xf32>
    %cst_27 = arith.constant 0.000000e+00 : f32
    %83 = vector.broadcast %cst_27 : f32 to vector<8x128xf32>
    %84 = arith.maximumf %82, %83 : vector<8x128xf32>
    %c24 = arith.constant 24 : index
    %c0_28 = arith.constant 0 : index
    %85 = vector.load %arg2[%c24, %c0_28] : memref<136x32xf32, #tpu.memory_space<vmem>>, vector<16x8xf32>
    %cst_29 = arith.constant dense<0.000000e+00> : vector<16x128xf32>
    %86 = tpu.matmul %85, %84, %cst_29 {dimension_numbers = #tpu.dot_dimension_numbers<[1], [0], [0], [1], [0, 0, 1, 1], [], []>} : vector<16x8xf32>, vector<8x128xf32>, vector<16x128xf32> -> vector<16x128xf32>
    %87 = vector.broadcast %4 : vector<1x128xf32> to vector<16x128xf32>
    %88 = arith.mulf %86, %87 : vector<16x128xf32>
    %cst_30 = arith.constant dense<0.000000e+00> : vector<16xf32>
    %89 = vector.multi_reduction <add>, %88, %cst_30 [1] : vector<16x128xf32> to vector<16xf32>
    %90 = vector.shape_cast %89 : vector<16xf32> to vector<16x1xf32>
    %91 = arith.mulf %88, %86 : vector<16x128xf32>
    %cst_31 = arith.constant dense<0.000000e+00> : vector<16xf32>
    %92 = vector.multi_reduction <add>, %91, %cst_31 [1] : vector<16x128xf32> to vector<16xf32>
    %93 = vector.shape_cast %92 : vector<16xf32> to vector<16x1xf32>
    %cst_32 = arith.constant 1.562500e-02 : f32
    %94 = vector.broadcast %cst_32 : f32 to vector<16x1xf32>
    %95 = arith.mulf %90, %94 : vector<16x1xf32>
    %cst_33 = arith.constant 1.562500e-02 : f32
    %96 = vector.broadcast %cst_33 : f32 to vector<16x1xf32>
    %97 = arith.mulf %93, %96 : vector<16x1xf32>
    %98 = arith.mulf %95, %95 : vector<16x1xf32>
    %99 = arith.subf %97, %98 : vector<16x1xf32>
    %cst_34 = arith.constant 0.000000e+00 : f32
    %100 = vector.broadcast %cst_34 : f32 to vector<16x1xf32>
    %101 = arith.maximumf %99, %100 : vector<16x1xf32>
    %102 = vector.broadcast %95 : vector<16x1xf32> to vector<16x128xf32>
    %103 = arith.subf %86, %102 : vector<16x128xf32>
    %cst_35 = arith.constant 9.99999974E-5 : f32
    %104 = vector.broadcast %cst_35 : f32 to vector<16x1xf32>
    %105 = arith.addf %101, %104 : vector<16x1xf32>
    %106 = math.rsqrt %105 : vector<16x1xf32>
    %107 = vector.broadcast %106 : vector<16x1xf32> to vector<16x128xf32>
    %108 = arith.mulf %103, %107 : vector<16x128xf32>
    %cst_36 = arith.constant 0.000000e+00 : f32
    %109 = vector.broadcast %cst_36 : f32 to vector<16x128xf32>
    %110 = arith.maximumf %108, %109 : vector<16x128xf32>
    %c40 = arith.constant 40 : index
    %c0_37 = arith.constant 0 : index
    %111 = vector.load %arg2[%c40, %c0_37] : memref<136x32xf32, #tpu.memory_space<vmem>>, vector<16x16xf32>
    %cst_38 = arith.constant dense<0.000000e+00> : vector<16x128xf32>
    %112 = tpu.matmul %111, %110, %cst_38 {dimension_numbers = #tpu.dot_dimension_numbers<[1], [0], [0], [1], [0, 0, 1, 1], [], []>} : vector<16x16xf32>, vector<16x128xf32>, vector<16x128xf32> -> vector<16x128xf32>
    %113 = vector.broadcast %4 : vector<1x128xf32> to vector<16x128xf32>
    %114 = arith.mulf %112, %113 : vector<16x128xf32>
    %cst_39 = arith.constant dense<0.000000e+00> : vector<16xf32>
    %115 = vector.multi_reduction <add>, %114, %cst_39 [1] : vector<16x128xf32> to vector<16xf32>
    %116 = vector.shape_cast %115 : vector<16xf32> to vector<16x1xf32>
    %117 = arith.mulf %114, %112 : vector<16x128xf32>
    %cst_40 = arith.constant dense<0.000000e+00> : vector<16xf32>
    %118 = vector.multi_reduction <add>, %117, %cst_40 [1] : vector<16x128xf32> to vector<16xf32>
    %119 = vector.shape_cast %118 : vector<16xf32> to vector<16x1xf32>
    %cst_41 = arith.constant 1.562500e-02 : f32
    %120 = vector.broadcast %cst_41 : f32 to vector<16x1xf32>
    %121 = arith.mulf %116, %120 : vector<16x1xf32>
    %cst_42 = arith.constant 1.562500e-02 : f32
    %122 = vector.broadcast %cst_42 : f32 to vector<16x1xf32>
    %123 = arith.mulf %119, %122 : vector<16x1xf32>
    %124 = arith.mulf %121, %121 : vector<16x1xf32>
    %125 = arith.subf %123, %124 : vector<16x1xf32>
    %cst_43 = arith.constant 0.000000e+00 : f32
    %126 = vector.broadcast %cst_43 : f32 to vector<16x1xf32>
    %127 = arith.maximumf %125, %126 : vector<16x1xf32>
    %128 = vector.broadcast %121 : vector<16x1xf32> to vector<16x128xf32>
    %129 = arith.subf %112, %128 : vector<16x128xf32>
    %cst_44 = arith.constant 9.99999974E-5 : f32
    %130 = vector.broadcast %cst_44 : f32 to vector<16x1xf32>
    %131 = arith.addf %127, %130 : vector<16x1xf32>
    %132 = math.rsqrt %131 : vector<16x1xf32>
    %133 = vector.broadcast %132 : vector<16x1xf32> to vector<16x128xf32>
    %134 = arith.mulf %129, %133 : vector<16x128xf32>
    %cst_45 = arith.constant 0.000000e+00 : f32
    %135 = vector.broadcast %cst_45 : f32 to vector<16x128xf32>
    %136 = arith.maximumf %134, %135 : vector<16x128xf32>
    %c56 = arith.constant 56 : index
    %c0_46 = arith.constant 0 : index
    %137 = vector.load %arg2[%c56, %c0_46] : memref<136x32xf32, #tpu.memory_space<vmem>>, vector<16x16xf32>
    %cst_47 = arith.constant dense<0.000000e+00> : vector<16x128xf32>
    %138 = tpu.matmul %137, %136, %cst_47 {dimension_numbers = #tpu.dot_dimension_numbers<[1], [0], [0], [1], [0, 0, 1, 1], [], []>} : vector<16x16xf32>, vector<16x128xf32>, vector<16x128xf32> -> vector<16x128xf32>
    %139 = vector.broadcast %4 : vector<1x128xf32> to vector<16x128xf32>
    %140 = arith.mulf %138, %139 : vector<16x128xf32>
    %cst_48 = arith.constant dense<0.000000e+00> : vector<16xf32>
    %141 = vector.multi_reduction <add>, %140, %cst_48 [1] : vector<16x128xf32> to vector<16xf32>
    %142 = vector.shape_cast %141 : vector<16xf32> to vector<16x1xf32>
    %143 = arith.mulf %140, %138 : vector<16x128xf32>
    %cst_49 = arith.constant dense<0.000000e+00> : vector<16xf32>
    %144 = vector.multi_reduction <add>, %143, %cst_49 [1] : vector<16x128xf32> to vector<16xf32>
    %145 = vector.shape_cast %144 : vector<16xf32> to vector<16x1xf32>
    %cst_50 = arith.constant 1.562500e-02 : f32
    %146 = vector.broadcast %cst_50 : f32 to vector<16x1xf32>
    %147 = arith.mulf %142, %146 : vector<16x1xf32>
    %cst_51 = arith.constant 1.562500e-02 : f32
    %148 = vector.broadcast %cst_51 : f32 to vector<16x1xf32>
    %149 = arith.mulf %145, %148 : vector<16x1xf32>
    %150 = arith.mulf %147, %147 : vector<16x1xf32>
    %151 = arith.subf %149, %150 : vector<16x1xf32>
    %cst_52 = arith.constant 0.000000e+00 : f32
    %152 = vector.broadcast %cst_52 : f32 to vector<16x1xf32>
    %153 = arith.maximumf %151, %152 : vector<16x1xf32>
    %154 = vector.broadcast %147 : vector<16x1xf32> to vector<16x128xf32>
    %155 = arith.subf %138, %154 : vector<16x128xf32>
    %cst_53 = arith.constant 9.99999974E-5 : f32
    %156 = vector.broadcast %cst_53 : f32 to vector<16x1xf32>
    %157 = arith.addf %153, %156 : vector<16x1xf32>
    %158 = math.rsqrt %157 : vector<16x1xf32>
    %159 = vector.broadcast %158 : vector<16x1xf32> to vector<16x128xf32>
    %160 = arith.mulf %155, %159 : vector<16x128xf32>
    %161 = arith.addf %160, %110 : vector<16x128xf32>
    %cst_54 = arith.constant 0.000000e+00 : f32
    %162 = vector.broadcast %cst_54 : f32 to vector<16x128xf32>
    %163 = arith.maximumf %161, %162 : vector<16x128xf32>
    %c72 = arith.constant 72 : index
    %c0_55 = arith.constant 0 : index
    %164 = vector.load %arg2[%c72, %c0_55] : memref<136x32xf32, #tpu.memory_space<vmem>>, vector<8x16xf32>
    %cst_56 = arith.constant dense<0.000000e+00> : vector<8x128xf32>
    %165 = tpu.matmul %164, %163, %cst_56 {dimension_numbers = #tpu.dot_dimension_numbers<[1], [0], [0], [1], [0, 0, 1, 1], [], []>} : vector<8x16xf32>, vector<16x128xf32>, vector<8x128xf32> -> vector<8x128xf32>
    %166 = vector.broadcast %4 : vector<1x128xf32> to vector<8x128xf32>
    %167 = arith.mulf %165, %166 : vector<8x128xf32>
    %cst_57 = arith.constant dense<0.000000e+00> : vector<8xf32>
    %168 = vector.multi_reduction <add>, %167, %cst_57 [1] : vector<8x128xf32> to vector<8xf32>
    %169 = vector.shape_cast %168 : vector<8xf32> to vector<8x1xf32>
    %170 = arith.mulf %167, %165 : vector<8x128xf32>
    %cst_58 = arith.constant dense<0.000000e+00> : vector<8xf32>
    %171 = vector.multi_reduction <add>, %170, %cst_58 [1] : vector<8x128xf32> to vector<8xf32>
    %172 = vector.shape_cast %171 : vector<8xf32> to vector<8x1xf32>
    %cst_59 = arith.constant 1.562500e-02 : f32
    %173 = vector.broadcast %cst_59 : f32 to vector<8x1xf32>
    %174 = arith.mulf %169, %173 : vector<8x1xf32>
    %cst_60 = arith.constant 1.562500e-02 : f32
    %175 = vector.broadcast %cst_60 : f32 to vector<8x1xf32>
    %176 = arith.mulf %172, %175 : vector<8x1xf32>
    %177 = arith.mulf %174, %174 : vector<8x1xf32>
    %178 = arith.subf %176, %177 : vector<8x1xf32>
    %cst_61 = arith.constant 0.000000e+00 : f32
    %179 = vector.broadcast %cst_61 : f32 to vector<8x1xf32>
    %180 = arith.maximumf %178, %179 : vector<8x1xf32>
    %181 = vector.broadcast %174 : vector<8x1xf32> to vector<8x128xf32>
    %182 = arith.subf %165, %181 : vector<8x128xf32>
    %cst_62 = arith.constant 9.99999974E-5 : f32
    %183 = vector.broadcast %cst_62 : f32 to vector<8x1xf32>
    %184 = arith.addf %180, %183 : vector<8x1xf32>
    %185 = math.rsqrt %184 : vector<8x1xf32>
    %186 = vector.broadcast %185 : vector<8x1xf32> to vector<8x128xf32>
    %187 = arith.mulf %182, %186 : vector<8x128xf32>
    %cst_63 = arith.constant 0.000000e+00 : f32
    %188 = vector.broadcast %cst_63 : f32 to vector<8x128xf32>
    %189 = arith.maximumf %187, %188 : vector<8x128xf32>
    %190 = tpu.concatenate %84, %189 in 0 : vector<8x128xf32>, vector<8x128xf32> -> vector<16x128xf32>
    %c80 = arith.constant 80 : index
    %c0_64 = arith.constant 0 : index
    %191 = vector.load %arg2[%c80, %c0_64] : memref<136x32xf32, #tpu.memory_space<vmem>>, vector<8x16xf32>
    %cst_65 = arith.constant dense<0.000000e+00> : vector<8x128xf32>
    %192 = tpu.matmul %191, %190, %cst_65 {dimension_numbers = #tpu.dot_dimension_numbers<[1], [0], [0], [1], [0, 0, 1, 1], [], []>} : vector<8x16xf32>, vector<16x128xf32>, vector<8x128xf32> -> vector<8x128xf32>
    %193 = vector.broadcast %4 : vector<1x128xf32> to vector<8x128xf32>
    %194 = arith.mulf %192, %193 : vector<8x128xf32>
    %cst_66 = arith.constant dense<0.000000e+00> : vector<8xf32>
    %195 = vector.multi_reduction <add>, %194, %cst_66 [1] : vector<8x128xf32> to vector<8xf32>
    %196 = vector.shape_cast %195 : vector<8xf32> to vector<8x1xf32>
    %197 = arith.mulf %194, %192 : vector<8x128xf32>
    %cst_67 = arith.constant dense<0.000000e+00> : vector<8xf32>
    %198 = vector.multi_reduction <add>, %197, %cst_67 [1] : vector<8x128xf32> to vector<8xf32>
    %199 = vector.shape_cast %198 : vector<8xf32> to vector<8x1xf32>
    %cst_68 = arith.constant 1.562500e-02 : f32
    %200 = vector.broadcast %cst_68 : f32 to vector<8x1xf32>
    %201 = arith.mulf %196, %200 : vector<8x1xf32>
    %cst_69 = arith.constant 1.562500e-02 : f32
    %202 = vector.broadcast %cst_69 : f32 to vector<8x1xf32>
    %203 = arith.mulf %199, %202 : vector<8x1xf32>
    %204 = arith.mulf %201, %201 : vector<8x1xf32>
    %205 = arith.subf %203, %204 : vector<8x1xf32>
    %cst_70 = arith.constant 0.000000e+00 : f32
    %206 = vector.broadcast %cst_70 : f32 to vector<8x1xf32>
    %207 = arith.maximumf %205, %206 : vector<8x1xf32>
    %208 = vector.broadcast %201 : vector<8x1xf32> to vector<8x128xf32>
    %209 = arith.subf %192, %208 : vector<8x128xf32>
    %cst_71 = arith.constant 9.99999974E-5 : f32
    %210 = vector.broadcast %cst_71 : f32 to vector<8x1xf32>
    %211 = arith.addf %207, %210 : vector<8x1xf32>
    %212 = math.rsqrt %211 : vector<8x1xf32>
    %213 = vector.broadcast %212 : vector<8x1xf32> to vector<8x128xf32>
    %214 = arith.mulf %209, %213 : vector<8x128xf32>
    %c88 = arith.constant 88 : index
    %c0_72 = arith.constant 0 : index
    %215 = vector.load %arg2[%c88, %c0_72] : memref<136x32xf32, #tpu.memory_space<vmem>>, vector<8x16xf32>
    %cst_73 = arith.constant dense<0.000000e+00> : vector<8x128xf32>
    %216 = tpu.matmul %215, %190, %cst_73 {dimension_numbers = #tpu.dot_dimension_numbers<[1], [0], [0], [1], [0, 0, 1, 1], [], []>} : vector<8x16xf32>, vector<16x128xf32>, vector<8x128xf32> -> vector<8x128xf32>
    %217 = vector.broadcast %4 : vector<1x128xf32> to vector<8x128xf32>
    %218 = arith.mulf %216, %217 : vector<8x128xf32>
    %cst_74 = arith.constant dense<0.000000e+00> : vector<8xf32>
    %219 = vector.multi_reduction <add>, %218, %cst_74 [1] : vector<8x128xf32> to vector<8xf32>
    %220 = vector.shape_cast %219 : vector<8xf32> to vector<8x1xf32>
    %221 = arith.mulf %218, %216 : vector<8x128xf32>
    %cst_75 = arith.constant dense<0.000000e+00> : vector<8xf32>
    %222 = vector.multi_reduction <add>, %221, %cst_75 [1] : vector<8x128xf32> to vector<8xf32>
    %223 = vector.shape_cast %222 : vector<8xf32> to vector<8x1xf32>
    %cst_76 = arith.constant 1.562500e-02 : f32
    %224 = vector.broadcast %cst_76 : f32 to vector<8x1xf32>
    %225 = arith.mulf %220, %224 : vector<8x1xf32>
    %cst_77 = arith.constant 1.562500e-02 : f32
    %226 = vector.broadcast %cst_77 : f32 to vector<8x1xf32>
    %227 = arith.mulf %223, %226 : vector<8x1xf32>
    %228 = arith.mulf %225, %225 : vector<8x1xf32>
    %229 = arith.subf %227, %228 : vector<8x1xf32>
    %cst_78 = arith.constant 0.000000e+00 : f32
    %230 = vector.broadcast %cst_78 : f32 to vector<8x1xf32>
    %231 = arith.maximumf %229, %230 : vector<8x1xf32>
    %232 = vector.broadcast %225 : vector<8x1xf32> to vector<8x128xf32>
    %233 = arith.subf %216, %232 : vector<8x128xf32>
    %cst_79 = arith.constant 9.99999974E-5 : f32
    %234 = vector.broadcast %cst_79 : f32 to vector<8x1xf32>
    %235 = arith.addf %231, %234 : vector<8x1xf32>
    %236 = math.rsqrt %235 : vector<8x1xf32>
    %237 = vector.broadcast %236 : vector<8x1xf32> to vector<8x128xf32>
    %238 = arith.mulf %233, %237 : vector<8x128xf32>
    %cst_80 = arith.constant 0.000000e+00 : f32
    %239 = vector.broadcast %cst_80 : f32 to vector<8x128xf32>
    %240 = arith.maximumf %238, %239 : vector<8x128xf32>
    %c96 = arith.constant 96 : index
    %c0_81 = arith.constant 0 : index
    %241 = vector.load %arg2[%c96, %c0_81] : memref<136x32xf32, #tpu.memory_space<vmem>>, vector<8x8xf32>
    %cst_82 = arith.constant dense<0.000000e+00> : vector<8x128xf32>
    %242 = tpu.matmul %241, %240, %cst_82 {dimension_numbers = #tpu.dot_dimension_numbers<[1], [0], [0], [1], [0, 0, 1, 1], [], []>} : vector<8x8xf32>, vector<8x128xf32>, vector<8x128xf32> -> vector<8x128xf32>
    %243 = vector.broadcast %4 : vector<1x128xf32> to vector<8x128xf32>
    %244 = arith.mulf %242, %243 : vector<8x128xf32>
    %cst_83 = arith.constant dense<0.000000e+00> : vector<8xf32>
    %245 = vector.multi_reduction <add>, %244, %cst_83 [1] : vector<8x128xf32> to vector<8xf32>
    %246 = vector.shape_cast %245 : vector<8xf32> to vector<8x1xf32>
    %247 = arith.mulf %244, %242 : vector<8x128xf32>
    %cst_84 = arith.constant dense<0.000000e+00> : vector<8xf32>
    %248 = vector.multi_reduction <add>, %247, %cst_84 [1] : vector<8x128xf32> to vector<8xf32>
    %249 = vector.shape_cast %248 : vector<8xf32> to vector<8x1xf32>
    %cst_85 = arith.constant 1.562500e-02 : f32
    %250 = vector.broadcast %cst_85 : f32 to vector<8x1xf32>
    %251 = arith.mulf %246, %250 : vector<8x1xf32>
    %cst_86 = arith.constant 1.562500e-02 : f32
    %252 = vector.broadcast %cst_86 : f32 to vector<8x1xf32>
    %253 = arith.mulf %249, %252 : vector<8x1xf32>
    %254 = arith.mulf %251, %251 : vector<8x1xf32>
    %255 = arith.subf %253, %254 : vector<8x1xf32>
    %cst_87 = arith.constant 0.000000e+00 : f32
    %256 = vector.broadcast %cst_87 : f32 to vector<8x1xf32>
    %257 = arith.maximumf %255, %256 : vector<8x1xf32>
    %258 = vector.broadcast %251 : vector<8x1xf32> to vector<8x128xf32>
    %259 = arith.subf %242, %258 : vector<8x128xf32>
    %cst_88 = arith.constant 9.99999974E-5 : f32
    %260 = vector.broadcast %cst_88 : f32 to vector<8x1xf32>
    %261 = arith.addf %257, %260 : vector<8x1xf32>
    %262 = math.rsqrt %261 : vector<8x1xf32>
    %263 = vector.broadcast %262 : vector<8x1xf32> to vector<8x128xf32>
    %264 = arith.mulf %259, %263 : vector<8x128xf32>
    %265 = arith.addf %264, %214 : vector<8x128xf32>
    %cst_89 = arith.constant 0.000000e+00 : f32
    %266 = vector.broadcast %cst_89 : f32 to vector<8x128xf32>
    %267 = arith.maximumf %265, %266 : vector<8x128xf32>
    %c104 = arith.constant 104 : index
    %c0_90 = arith.constant 0 : index
    %268 = vector.load %arg2[%c104, %c0_90] : memref<136x32xf32, #tpu.memory_space<vmem>>, vector<24x8xf32>
    %cst_91 = arith.constant dense<0.000000e+00> : vector<24x128xf32>
    %269 = tpu.matmul %268, %267, %cst_91 {dimension_numbers = #tpu.dot_dimension_numbers<[1], [0], [0], [1], [0, 0, 1, 1], [], []>} : vector<24x8xf32>, vector<8x128xf32>, vector<24x128xf32> -> vector<24x128xf32>
    %270 = vector.broadcast %4 : vector<1x128xf32> to vector<24x128xf32>
    %271 = arith.mulf %269, %270 : vector<24x128xf32>
    %cst_92 = arith.constant dense<0.000000e+00> : vector<24xf32>
    %272 = vector.multi_reduction <add>, %271, %cst_92 [1] : vector<24x128xf32> to vector<24xf32>
    %273 = vector.shape_cast %272 : vector<24xf32> to vector<24x1xf32>
    %274 = arith.mulf %271, %269 : vector<24x128xf32>
    %cst_93 = arith.constant dense<0.000000e+00> : vector<24xf32>
    %275 = vector.multi_reduction <add>, %274, %cst_93 [1] : vector<24x128xf32> to vector<24xf32>
    %276 = vector.shape_cast %275 : vector<24xf32> to vector<24x1xf32>
    %cst_94 = arith.constant 1.562500e-02 : f32
    %277 = vector.broadcast %cst_94 : f32 to vector<24x1xf32>
    %278 = arith.mulf %273, %277 : vector<24x1xf32>
    %cst_95 = arith.constant 1.562500e-02 : f32
    %279 = vector.broadcast %cst_95 : f32 to vector<24x1xf32>
    %280 = arith.mulf %276, %279 : vector<24x1xf32>
    %281 = arith.mulf %278, %278 : vector<24x1xf32>
    %282 = arith.subf %280, %281 : vector<24x1xf32>
    %cst_96 = arith.constant 0.000000e+00 : f32
    %283 = vector.broadcast %cst_96 : f32 to vector<24x1xf32>
    %284 = arith.maximumf %282, %283 : vector<24x1xf32>
    %285 = vector.broadcast %278 : vector<24x1xf32> to vector<24x128xf32>
    %286 = arith.subf %269, %285 : vector<24x128xf32>
    %cst_97 = arith.constant 9.99999974E-5 : f32
    %287 = vector.broadcast %cst_97 : f32 to vector<24x1xf32>
    %288 = arith.addf %284, %287 : vector<24x1xf32>
    %289 = math.rsqrt %288 : vector<24x1xf32>
    %290 = vector.broadcast %289 : vector<24x1xf32> to vector<24x128xf32>
    %291 = arith.mulf %286, %290 : vector<24x128xf32>
    %cst_98 = arith.constant 0.000000e+00 : f32
    %292 = vector.broadcast %cst_98 : f32 to vector<24x128xf32>
    %293 = arith.maximumf %291, %292 : vector<24x128xf32>
    %c128 = arith.constant 128 : index
    %c0_99 = arith.constant 0 : index
    %294 = vector.load %arg2[%c128, %c0_99] : memref<136x32xf32, #tpu.memory_space<vmem>>, vector<8x24xf32>
    %cst_100 = arith.constant dense<0.000000e+00> : vector<8x128xf32>
    %295 = tpu.matmul %294, %293, %cst_100 {dimension_numbers = #tpu.dot_dimension_numbers<[1], [0], [0], [1], [0, 0, 1, 1], [], []>} : vector<8x24xf32>, vector<24x128xf32>, vector<8x128xf32> -> vector<8x128xf32>
    %296 = tpu.iota {dimensions = array<i32: 0>} : vector<8x128xi32>
    %c1_i32 = arith.constant 1 : i32
    %297 = vector.broadcast %c1_i32 : i32 to vector<8x128xi32>
    %298 = arith.cmpi sge, %296, %297 : vector<8x128xi32>
    %c4_i32 = arith.constant 4 : i32
    %299 = vector.broadcast %c4_i32 : i32 to vector<8x128xi32>
    %300 = arith.cmpi slt, %296, %299 : vector<8x128xi32>
    %301 = arith.andi %298, %300 : vector<8x128xi1>
    %302 = arith.extui %301 : vector<8x128xi1> to vector<8x128xi32>
    %303 = arith.sitofp %302 : vector<8x128xi32> to vector<8x128xf32>
    %304 = arith.mulf %295, %295 : vector<8x128xf32>
    %305 = arith.mulf %304, %303 : vector<8x128xf32>
    %cst_101 = arith.constant dense<0.000000e+00> : vector<128xf32>
    %306 = vector.multi_reduction <add>, %305, %cst_101 [0] : vector<8x128xf32> to vector<128xf32>
    %307 = vector.shape_cast %306 : vector<128xf32> to vector<1x128xf32>
    %cst_102 = arith.constant 1.000000e-24 : f32
    %308 = vector.broadcast %cst_102 : f32 to vector<1x128xf32>
    %309 = arith.maximumf %307, %308 : vector<1x128xf32>
    %310 = math.rsqrt %309 : vector<1x128xf32>
    %311 = vector.broadcast %310 : vector<1x128xf32> to vector<8x128xf32>
    %312 = arith.mulf %303, %311 : vector<8x128xf32>
    %cst_103 = arith.constant 1.000000e+00 : f32
    %313 = vector.broadcast %cst_103 : f32 to vector<8x128xf32>
    %314 = arith.subf %313, %303 : vector<8x128xf32>
    %315 = arith.addf %312, %314 : vector<8x128xf32>
    %316 = arith.mulf %295, %315 : vector<8x128xf32>
    %c0_104 = arith.constant 0 : index
    %c0_105 = arith.constant 0 : index
    %317 = vector.load %arg3[%c0_104, %c0_105] : memref<8x128xf32, #tpu.memory_space<vmem>>, vector<8x128xf32>
    tpu.vector_store %arg3[%c0_104, %c0_105], %316 {strides = array<i32>} : memref<8x128xf32, #tpu.memory_space<vmem>>, vector<8x128xf32>,
    return
  }
  func.func @transform_0(%arg0: i32) -> (i32, i32) {
    %c0_i32 = arith.constant 0 : i32
    %c0_i32_0 = arith.constant 0 : i32
    %c0_i32_1 = arith.constant 0 : i32
    return %c0_i32, %c0_i32_0 : i32, i32
  }
  func.func @transform_1(%arg0: i32) -> (i32, i32) {
    %c0_i32 = arith.constant 0 : i32
    %c0_i32_0 = arith.constant 0 : i32
    %c0_i32_1 = arith.constant 0 : i32
    return %c0_i32, %c0_i32_0 : i32, i32
  }
  func.func @transform_2(%arg0: i32) -> (i32, i32) {
    %c0_i32 = arith.constant 0 : i32
    %c0_i32_0 = arith.constant 0 : i32
    %c0_i32_1 = arith.constant 0 : i32
    return %c0_i32, %c0_i32_0 : i32, i32
  }
}

</mosaic_0001>

<llo_original>
// kernel: smart_tree_forward.1
$region0: #{smart_tree_forward.1}
  #allocation0 [shape = 'u32[]', space=smem, size = 0x4, offset = 0x4, fixed_abs, tag = 'smem constant byte address 0x4 - core index']
  #allocation1 [shape = 'u32[144,128]{1,0:T(1,128)}', space=vmem, size = 0x12000, scoped, tag = 'internal scratch']
  %s0 = inlined_call_operand.vmem [shape: f32[8,128], index: 0, kind: input, shape index: {}]
  %s1 = inlined_call_operand.vmem [shape: f32[136,32], index: 1, kind: input, shape index: {}]
  %s2 = inlined_call_operand.vmem [shape: f32[8,128], index: 2, kind: output, shape index: {}]
  %s3 = sld [smem:[#allocation0]]
  $region18: #{smart_tree_forward.1} parent=0
    _
  %s5 = ssub.s32 1, %s3
  %s6 = scalar_select 0, %s5, %s3
  // Predicated region
  $region2: #{smart_tree_forward.1} parent=0 // pred_check
    _
  $region3: #{smart_tree_forward.1} parent=0 // pred_check_branch
    %8 = sbr.rel (0) target = $region5
  $region4: #{smart_tree_forward.1} parent=0 // pred_region
    _
  $region5: #{smart_tree_forward.1} parent=0 // pred_fallthru
    _
  // Predicated region
  $region6: #{smart_tree_forward.1} parent=0 // pred_check
    _
  $region7: #{smart_tree_forward.1} parent=0 // pred_check_branch
    %10 = sbr.rel (0) target = $region9
  $region8: #{smart_tree_forward.1} parent=0 // pred_region
    _
  $region9: #{smart_tree_forward.1} parent=0 // pred_fallthru
    _
  %v11 = vlaneseq
  %v12 = vand.u32 %v11, 127
  %vm13 = vcmp.lt.s32.totalorder %v12, 64
  %v14 = vsel %vm13, 1, 0
  %v15 = vcvt.s32.f32 %v14
  %v16 = vld [vmem:[%s0] sm:$0xff]
  %v17 = vld [vmem:[%s1] sm:$0xff]
  %vm18 = vcmask 64512
  %v20 = vsel %vm18, %v17, 0
  %22 = vmatprep.subr.mxu0 0.0
  %23 = vmatpush1.msra.mxu0 %v16
  %24 = vmatprep.subr.mxu0 0.0
  %25 = vmatpush1.msra.mxu0 0.0
  %26 = vmatprep.subr.mxu0 0.0
  %27 = vmatpush1.msra.mxu0 0.0
  %28 = vmatprep.subr.mxu0 0.0
  %29 = vmatpush1.msra.mxu0 0.0
  %30 = vmatprep.subr.mxu0 0.0
  %31 = vmatpush1.msra.mxu0 0.0
  %32 = vmatprep.subr.mxu0 0.0
  %33 = vmatpush1.msra.mxu0 0.0
  %34 = vmatprep.subr.mxu0 0.0
  %35 = vmatpush1.msra.mxu0 0.0
  %36 = vmatprep.subr.mxu0 0.0
  %37 = vmatpush1.msra.mxu0 0.0
  %38 = vmatprep.subr.mxu0 0.0
  %39 = vmatpush1.msra.mxu0 0.0
  %40 = vmatprep.subr.mxu0 0.0
  %41 = vmatpush1.msra.mxu0 0.0
  %42 = vmatprep.subr.mxu0 0.0
  %43 = vmatpush1.msra.mxu0 0.0
  %44 = vmatprep.subr.mxu0 0.0
  %45 = vmatpush1.msra.mxu0 0.0
  %46 = vmatprep.subr.mxu0 0.0
  %47 = vmatpush1.msra.mxu0 0.0
  %48 = vmatprep.subr.mxu0 0.0
  %49 = vmatpush1.msra.mxu0 0.0
  %50 = vmatprep.subr.mxu0 0.0
  %51 = vmatpush1.msra.mxu0 0.0
  %52 = vmatprep.subr.mxu0 0.0
  %53 = vmatpush1.msra.mxu0 0.0
  %54 = vmatprep.subr.mxu0 0.0
  %55 = vmatpush1.msra.mxu0 0.0
  %56 = vmatprep.subr.mxu0 0.0
  %57 = vmatpush1.msra.mxu0 0.0
  %58 = vmatprep.subr.mxu0 0.0
  %59 = vmatpush1.msra.mxu0 0.0
  %60 = vmatprep.subr.mxu0 0.0
  %61 = vmatpush1.msra.mxu0 0.0
  %62 = vmatprep.subr.mxu0 0.0
  %63 = vmatpush1.msra.mxu0 0.0
  %64 = vmatprep.subr.mxu0 0.0
  %65 = vmatpush1.msra.mxu0 0.0
  %66 = vmatprep.subr.mxu0 0.0
  %67 = vmatpush1.msra.mxu0 0.0
  %68 = vmatprep.subr.mxu0 0.0
  %69 = vmatpush1.msra.mxu0 0.0
  %70 = vmatprep.subr.mxu0 0.0
  %71 = vmatpush1.msra.mxu0 0.0
  %72 = vmatprep.subr.mxu0 0.0
  %73 = vmatpush1.msra.mxu0 0.0
  %74 = vmatprep.subr.mxu0 0.0
  %75 = vmatpush1.msra.mxu0 0.0
  %76 = vmatprep.subr.mxu0 0.0
  %77 = vmatpush1.msra.mxu0 0.0
  %78 = vmatprep.subr.mxu0 0.0
  %79 = vmatpush1.msra.mxu0 0.0
  %80 = vmatprep.subr.mxu0 0.0
  %81 = vmatpush1.msra.mxu0 0.0
  %82 = vmatprep.subr.mxu0 0.0
  %83 = vmatpush1.msra.mxu0 0.0
  %84 = vmatprep.subr.mxu0 0.0
  %85 = vmatpush1.msra.mxu0 0.0
  %86 = vmatprep.mubr.f32.mxu0 0.0
  %87 = vmatmul.mubr.f32.gmra.mrb[0].mxu0 %v20
  %v88 = vpop.f32.mrb[0].mxu0
  %v89 = vadd.f32 0.0, %v88
  %v90 = vpop.f32.mrb[0].mxu0
  %91 = vdwg.mxu0
  %v92 = vmul.f32 %v89, %v15
  %93 = vadd.xlane.f32.xlu0 %v92
  %v94 = vpop.xlane.xlu0 %93
  %v95 = vmul.f32 %v92, %v89
  %96 = vadd.xlane.f32.xlu0 %v95
  %v97 = vpop.xlane.xlu0 %96
  %v98 = vmul.f32 %v94, 0.015625
  %v99 = vmul.f32 %v97, 0.015625
  %v100 = vmul.f32 %v98, %v98
  %v101 = vsub.f32 %v99, %v100
  %v102 = vmax.f32 %v101, 0.0
  %v103 = vsub.f32 %v89, %v98
  %v104 = vadd.f32 %v102, 0.0001
  %v105 = vrsqrt.pop %v104
  %v106 = vmul.f32 %v103, %v105
  %v107 = vmax.f32 %v106, 0.0
  %v108 = vld [vmem:[%s1 + $0x8] sm:$0xff]
  %v110 = vsel %vm18, %v108, 0
  %112 = vmatprep.subr.mxu0 0.0
  %113 = vmatpush1.msra.mxu0 %v107
  %114 = vmatprep.subr.mxu0 0.0
  %115 = vmatpush1.msra.mxu0 0.0
  %116 = vmatprep.subr.mxu0 0.0
  %117 = vmatpush1.msra.mxu0 0.0
  %118 = vmatprep.subr.mxu0 0.0
  %119 = vmatpush1.msra.mxu0 0.0
  %120 = vmatprep.subr.mxu0 0.0
  %121 = vmatpush1.msra.mxu0 0.0
  %122 = vmatprep.subr.mxu0 0.0
  %123 = vmatpush1.msra.mxu0 0.0
  %124 = vmatprep.subr.mxu0 0.0
  %125 = vmatpush1.msra.mxu0 0.0
  %126 = vmatprep.subr.mxu0 0.0
  %127 = vmatpush1.msra.mxu0 0.0
  %128 = vmatprep.subr.mxu0 0.0
  %129 = vmatpush1.msra.mxu0 0.0
  %130 = vmatprep.subr.mxu0 0.0
  %131 = vmatpush1.msra.mxu0 0.0
  %132 = vmatprep.subr.mxu0 0.0
  %133 = vmatpush1.msra.mxu0 0.0
  %134 = vmatprep.subr.mxu0 0.0
  %135 = vmatpush1.msra.mxu0 0.0
  %136 = vmatprep.subr.mxu0 0.0
  %137 = vmatpush1.msra.mxu0 0.0
  %138 = vmatprep.subr.mxu0 0.0
  %139 = vmatpush1.msra.mxu0 0.0
  %140 = vmatprep.subr.mxu0 0.0
  %141 = vmatpush1.msra.mxu0 0.0
  %142 = vmatprep.subr.mxu0 0.0
  %143 = vmatpush1.msra.mxu0 0.0
  %144 = vmatprep.subr.mxu0 0.0
  %145 = vmatpush1.msra.mxu0 0.0
  %146 = vmatprep.subr.mxu0 0.0
  %147 = vmatpush1.msra.mxu0 0.0
  %148 = vmatprep.subr.mxu0 0.0
  %149 = vmatpush1.msra.mxu0 0.0
  %150 = vmatprep.subr.mxu0 0.0
  %151 = vmatpush1.msra.mxu0 0.0
  %152 = vmatprep.subr.mxu0 0.0
  %153 = vmatpush1.msra.mxu0 0.0
  %154 = vmatprep.subr.mxu0 0.0
  %155 = vmatpush1.msra.mxu0 0.0
  %156 = vmatprep.subr.mxu0 0.0
  %157 = vmatpush1.msra.mxu0 0.0
  %158 = vmatprep.subr.mxu0 0.0
  %159 = vmatpush1.msra.mxu0 0.0
  %160 = vmatprep.subr.mxu0 0.0
  %161 = vmatpush1.msra.mxu0 0.0
  %162 = vmatprep.subr.mxu0 0.0
  %163 = vmatpush1.msra.mxu0 0.0
  %164 = vmatprep.subr.mxu0 0.0
  %165 = vmatpush1.msra.mxu0 0.0
  %166 = vmatprep.subr.mxu0 0.0
  %167 = vmatpush1.msra.mxu0 0.0
  %168 = vmatprep.subr.mxu0 0.0
  %169 = vmatpush1.msra.mxu0 0.0
  %170 = vmatprep.subr.mxu0 0.0
  %171 = vmatpush1.msra.mxu0 0.0
  %172 = vmatprep.subr.mxu0 0.0
  %173 = vmatpush1.msra.mxu0 0.0
  %174 = vmatprep.subr.mxu0 0.0
  %175 = vmatpush1.msra.mxu0 0.0
  %176 = vmatprep.mubr.f32.mxu0 0.0
  %177 = vmatmul.mubr.f32.gmra.mrb[0].mxu0 %v110
  %v178 = vpop.f32.mrb[0].mxu0
  %v179 = vadd.f32 0.0, %v178
  %v180 = vpop.f32.mrb[0].mxu0
  %181 = vdwg.mxu0
  %v182 = vmul.f32 %v179, %v15
  %183 = vadd.xlane.f32.xlu0 %v182
  %v184 = vpop.xlane.xlu0 %183
  %v185 = vmul.f32 %v182, %v179
  %186 = vadd.xlane.f32.xlu0 %v185
  %v187 = vpop.xlane.xlu0 %186
  %v188 = vmul.f32 %v184, 0.015625
  %v189 = vmul.f32 %v187, 0.015625
  %v190 = vmul.f32 %v188, %v188
  %v191 = vsub.f32 %v189, %v190
  %v192 = vmax.f32 %v191, 0.0
  %v193 = vsub.f32 %v179, %v188
  %v194 = vadd.f32 %v192, 0.0001
  %v195 = vrsqrt.pop %v194
  %v196 = vmul.f32 %v193, %v195
  %v197 = vmax.f32 %v196, 0.0
  %v198 = vld [vmem:[%s1 + $0x10] sm:$0xff]
  %v200 = vsel %vm18, %v198, 0
  %202 = vmatprep.subr.mxu0 0.0
  %203 = vmatpush1.msra.mxu0 %v197
  %204 = vmatprep.subr.mxu0 0.0
  %205 = vmatpush1.msra.mxu0 0.0
  %206 = vmatprep.subr.mxu0 0.0
  %207 = vmatpush1.msra.mxu0 0.0
  %208 = vmatprep.subr.mxu0 0.0
  %209 = vmatpush1.msra.mxu0 0.0
  %210 = vmatprep.subr.mxu0 0.0
  %211 = vmatpush1.msra.mxu0 0.0
  %212 = vmatprep.subr.mxu0 0.0
  %213 = vmatpush1.msra.mxu0 0.0
  %214 = vmatprep.subr.mxu0 0.0
  %215 = vmatpush1.msra.mxu0 0.0
  %216 = vmatprep.subr.mxu0 0.0
  %217 = vmatpush1.msra.mxu0 0.0
  %218 = vmatprep.subr.mxu0 0.0
  %219 = vmatpush1.msra.mxu0 0.0
  %220 = vmatprep.subr.mxu0 0.0
  %221 = vmatpush1.msra.mxu0 0.0
  %222 = vmatprep.subr.mxu0 0.0
  %223 = vmatpush1.msra.mxu0 0.0
  %224 = vmatprep.subr.mxu0 0.0
  %225 = vmatpush1.msra.mxu0 0.0
  %226 = vmatprep.subr.mxu0 0.0
  %227 = vmatpush1.msra.mxu0 0.0
  %228 = vmatprep.subr.mxu0 0.0
  %229 = vmatpush1.msra.mxu0 0.0
  %230 = vmatprep.subr.mxu0 0.0
  %231 = vmatpush1.msra.mxu0 0.0
  %232 = vmatprep.subr.mxu0 0.0
  %233 = vmatpush1.msra.mxu0 0.0
  %234 = vmatprep.subr.mxu0 0.0
  %235 = vmatpush1.msra.mxu0 0.0
  %236 = vmatprep.subr.mxu0 0.0
  %237 = vmatpush1.msra.mxu0 0.0
  %238 = vmatprep.subr.mxu0 0.0
  %239 = vmatpush1.msra.mxu0 0.0
  %240 = vmatprep.subr.mxu0 0.0
  %241 = vmatpush1.msra.mxu0 0.0
  %242 = vmatprep.subr.mxu0 0.0
  %243 = vmatpush1.msra.mxu0 0.0
  %244 = vmatprep.subr.mxu0 0.0
  %245 = vmatpush1.msra.mxu0 0.0
  %246 = vmatprep.subr.mxu0 0.0
  %247 = vmatpush1.msra.mxu0 0.0
  %248 = vmatprep.subr.mxu0 0.0
  %249 = vmatpush1.msra.mxu0 0.0
  %250 = vmatprep.subr.mxu0 0.0
  %251 = vmatpush1.msra.mxu0 0.0
  %252 = vmatprep.subr.mxu0 0.0
  %253 = vmatpush1.msra.mxu0 0.0
  %254 = vmatprep.subr.mxu0 0.0
  %255 = vmatpush1.msra.mxu0 0.0
  %256 = vmatprep.subr.mxu0 0.0
  %257 = vmatpush1.msra.mxu0 0.0
  %258 = vmatprep.subr.mxu0 0.0
  %259 = vmatpush1.msra.mxu0 0.0
  %260 = vmatprep.subr.mxu0 0.0
  %261 = vmatpush1.msra.mxu0 0.0
  %262 = vmatprep.subr.mxu0 0.0
  %263 = vmatpush1.msra.mxu0 0.0
  %264 = vmatprep.subr.mxu0 0.0
  %265 = vmatpush1.msra.mxu0 0.0
  %266 = vmatprep.mubr.f32.mxu0 0.0
  %267 = vmatmul.mubr.f32.gmra.mrb[0].mxu0 %v200
  %v268 = vpop.f32.mrb[0].mxu0
  %v269 = vadd.f32 0.0, %v268
  %v270 = vpop.f32.mrb[0].mxu0
  %271 = vdwg.mxu0
  %v272 = vmul.f32 %v269, %v15
  %273 = vadd.xlane.f32.xlu0 %v272
  %v274 = vpop.xlane.xlu0 %273
  %v275 = vmul.f32 %v272, %v269
  %276 = vadd.xlane.f32.xlu0 %v275
  %v277 = vpop.xlane.xlu0 %276
  %v278 = vmul.f32 %v274, 0.015625
  %v279 = vmul.f32 %v277, 0.015625
  %v280 = vmul.f32 %v278, %v278
  %v281 = vsub.f32 %v279, %v280
  %v282 = vmax.f32 %v281, 0.0
  %v283 = vsub.f32 %v269, %v278
  %v284 = vadd.f32 %v282, 0.0001
  %v285 = vrsqrt.pop %v284
  %v286 = vmul.f32 %v283, %v285
  %v287 = vadd.f32 %v286, %v107
  %v288 = vmax.f32 %v287, 0.0
  %v289 = vld [vmem:[%s1 + $0x18] sm:$0xff]
  %v290 = vld [vmem:[%s1 + $0x20] sm:$0xff]
  %v292 = vsel %vm18, %v289, 0
  %v295 = vsel %vm18, %v290, 0
  %297 = vmatprep.subr.mxu0 0.0
  %298 = vmatpush1.msra.mxu0 %v288
  %299 = vmatprep.subr.mxu0 0.0
  %300 = vmatpush1.msra.mxu0 0.0
  %301 = vmatprep.subr.mxu0 0.0
  %302 = vmatpush1.msra.mxu0 0.0
  %303 = vmatprep.subr.mxu0 0.0
  %304 = vmatpush1.msra.mxu0 0.0
  %305 = vmatprep.subr.mxu0 0.0
  %306 = vmatpush1.msra.mxu0 0.0
  %307 = vmatprep.subr.mxu0 0.0
  %308 = vmatpush1.msra.mxu0 0.0
  %309 = vmatprep.subr.mxu0 0.0
  %310 = vmatpush1.msra.mxu0 0.0
  %311 = vmatprep.subr.mxu0 0.0
  %312 = vmatpush1.msra.mxu0 0.0
  %313 = vmatprep.subr.mxu0 0.0
  %314 = vmatpush1.msra.mxu0 0.0
  %315 = vmatprep.subr.mxu0 0.0
  %316 = vmatpush1.msra.mxu0 0.0
  %317 = vmatprep.subr.mxu0 0.0
  %318 = vmatpush1.msra.mxu0 0.0
  %319 = vmatprep.subr.mxu0 0.0
  %320 = vmatpush1.msra.mxu0 0.0
  %321 = vmatprep.subr.mxu0 0.0
  %322 = vmatpush1.msra.mxu0 0.0
  %323 = vmatprep.subr.mxu0 0.0
  %324 = vmatpush1.msra.mxu0 0.0
  %325 = vmatprep.subr.mxu0 0.0
  %326 = vmatpush1.msra.mxu0 0.0
  %327 = vmatprep.subr.mxu0 0.0
  %328 = vmatpush1.msra.mxu0 0.0
  %329 = vmatprep.subr.mxu0 0.0
  %330 = vmatpush1.msra.mxu0 0.0
  %331 = vmatprep.subr.mxu0 0.0
  %332 = vmatpush1.msra.mxu0 0.0
  %333 = vmatprep.subr.mxu0 0.0
  %334 = vmatpush1.msra.mxu0 0.0
  %335 = vmatprep.subr.mxu0 0.0
  %336 = vmatpush1.msra.mxu0 0.0
  %337 = vmatprep.subr.mxu0 0.0
  %338 = vmatpush1.msra.mxu0 0.0
  %339 = vmatprep.subr.mxu0 0.0
  %340 = vmatpush1.msra.mxu0 0.0
  %341 = vmatprep.subr.mxu0 0.0
  %342 = vmatpush1.msra.mxu0 0.0
  %343 = vmatprep.subr.mxu0 0.0
  %344 = vmatpush1.msra.mxu0 0.0
  %345 = vmatprep.subr.mxu0 0.0
  %346 = vmatpush1.msra.mxu0 0.0
  %347 = vmatprep.subr.mxu0 0.0
  %348 = vmatpush1.msra.mxu0 0.0
  %349 = vmatprep.subr.mxu0 0.0
  %350 = vmatpush1.msra.mxu0 0.0
  %351 = vmatprep.subr.mxu0 0.0
  %352 = vmatpush1.msra.mxu0 0.0
  %353 = vmatprep.subr.mxu0 0.0
  %354 = vmatpush1.msra.mxu0 0.0
  %355 = vmatprep.subr.mxu0 0.0
  %356 = vmatpush1.msra.mxu0 0.0
  %357 = vmatprep.subr.mxu0 0.0
  %358 = vmatpush1.msra.mxu0 0.0
  %359 = vmatprep.subr.mxu0 0.0
  %360 = vmatpush1.msra.mxu0 0.0
  %361 = vmatprep.mubr.f32.mxu0 0.0
  %362 = vmatmul.mubr.f32.gmra.mrb[0].mxu0 %v292
  %v363 = vpop.f32.mrb[0].mxu0
  %v364 = vadd.f32 0.0, %v363
  %v365 = vpop.f32.mrb[0].mxu0
  %366 = vmatprep.mubr.f32.mxu0 0.0
  %367 = vmatmul.mubr.f32.gmra.mrb[0].mxu0 %v295
  %v368 = vpop.f32.mrb[0].mxu0
  %v369 = vadd.f32 0.0, %v368
  %v370 = vpop.f32.mrb[0].mxu0
  %371 = vdwg.mxu0
  %v372 = vmul.f32 %v364, %v15
  %v373 = vmul.f32 %v369, %v15
  %374 = vadd.xlane.f32.xlu0 %v372
  %v375 = vpop.xlane.xlu0 %374
  %376 = vadd.xlane.f32.xlu0 %v373
  %v377 = vpop.xlane.xlu0 %376
  %v378 = vmul.f32 %v372, %v364
  %v379 = vmul.f32 %v373, %v369
  %380 = vadd.xlane.f32.xlu0 %v378
  %v381 = vpop.xlane.xlu0 %380
  %382 = vadd.xlane.f32.xlu0 %v379
  %v383 = vpop.xlane.xlu0 %382
  %v384 = vmul.f32 %v375, 0.015625
  %v385 = vmul.f32 %v377, 0.015625
  %v386 = vmul.f32 %v381, 0.015625
  %v387 = vmul.f32 %v383, 0.015625
  %v388 = vmul.f32 %v384, %v384
  %v389 = vmul.f32 %v385, %v385
  %v390 = vsub.f32 %v386, %v388
  %v391 = vsub.f32 %v387, %v389
  %v392 = vmax.f32 %v390, 0.0
  %v393 = vmax.f32 %v391, 0.0
  %v394 = vsub.f32 %v364, %v384
  %v395 = vsub.f32 %v369, %v385
  %v396 = vadd.f32 %v392, 0.0001
  %v397 = vadd.f32 %v393, 0.0001
  %v398 = vrsqrt.pop %v396
  %v399 = vrsqrt.pop %v397
  %v400 = vmul.f32 %v394, %v398
  %v401 = vmul.f32 %v395, %v399
  %v402 = vmax.f32 %v400, 0.0
  %v403 = vmax.f32 %v401, 0.0
  %v404 = vld [vmem:[%s1 + $0x28] sm:$0xff]
  %v405 = vld [vmem:[%s1 + $0x30] sm:$0xff]
  %vm406 = vcmask 130048
  %v408 = vsel %vm406, %v404, 0
  %v411 = vsel %vm406, %v405, 0
  %413 = vmatprep.subr.mxu0 0.0
  %414 = vmatpush1.msra.mxu0 %v402
  %415 = vmatprep.subr.mxu0 0.0
  %416 = vmatpush1.msra.mxu0 %v403
  %417 = vmatprep.subr.mxu0 0.0
  %418 = vmatpush1.msra.mxu0 0.0
  %419 = vmatprep.subr.mxu0 0.0
  %420 = vmatpush1.msra.mxu0 0.0
  %421 = vmatprep.subr.mxu0 0.0
  %422 = vmatpush1.msra.mxu0 0.0
  %423 = vmatprep.subr.mxu0 0.0
  %424 = vmatpush1.msra.mxu0 0.0
  %425 = vmatprep.subr.mxu0 0.0
  %426 = vmatpush1.msra.mxu0 0.0
  %427 = vmatprep.subr.mxu0 0.0
  %428 = vmatpush1.msra.mxu0 0.0
  %429 = vmatprep.subr.mxu0 0.0
  %430 = vmatpush1.msra.mxu0 0.0
  %431 = vmatprep.subr.mxu0 0.0
  %432 = vmatpush1.msra.mxu0 0.0
  %433 = vmatprep.subr.mxu0 0.0
  %434 = vmatpush1.msra.mxu0 0.0
  %435 = vmatprep.subr.mxu0 0.0
  %436 = vmatpush1.msra.mxu0 0.0
  %437 = vmatprep.subr.mxu0 0.0
  %438 = vmatpush1.msra.mxu0 0.0
  %439 = vmatprep.subr.mxu0 0.0
  %440 = vmatpush1.msra.mxu0 0.0
  %441 = vmatprep.subr.mxu0 0.0
  %442 = vmatpush1.msra.mxu0 0.0
  %443 = vmatprep.subr.mxu0 0.0
  %444 = vmatpush1.msra.mxu0 0.0
  %445 = vmatprep.subr.mxu0 0.0
  %446 = vmatpush1.msra.mxu0 0.0
  %447 = vmatprep.subr.mxu0 0.0
  %448 = vmatpush1.msra.mxu0 0.0
  %449 = vmatprep.subr.mxu0 0.0
  %450 = vmatpush1.msra.mxu0 0.0
  %451 = vmatprep.subr.mxu0 0.0
  %452 = vmatpush1.msra.mxu0 0.0
  %453 = vmatprep.subr.mxu0 0.0
  %454 = vmatpush1.msra.mxu0 0.0
  %455 = vmatprep.subr.mxu0 0.0
  %456 = vmatpush1.msra.mxu0 0.0
  %457 = vmatprep.subr.mxu0 0.0
  %458 = vmatpush1.msra.mxu0 0.0
  %459 = vmatprep.subr.mxu0 0.0
  %460 = vmatpush1.msra.mxu0 0.0
  %461 = vmatprep.subr.mxu0 0.0
  %462 = vmatpush1.msra.mxu0 0.0
  %463 = vmatprep.subr.mxu0 0.0
  %464 = vmatpush1.msra.mxu0 0.0
  %465 = vmatprep.subr.mxu0 0.0
  %466 = vmatpush1.msra.mxu0 0.0
  %467 = vmatprep.subr.mxu0 0.0
  %468 = vmatpush1.msra.mxu0 0.0
  %469 = vmatprep.subr.mxu0 0.0
  %470 = vmatpush1.msra.mxu0 0.0
  %471 = vmatprep.subr.mxu0 0.0
  %472 = vmatpush1.msra.mxu0 0.0
  %473 = vmatprep.subr.mxu0 0.0
  %474 = vmatpush1.msra.mxu0 0.0
  %475 = vmatprep.subr.mxu0 0.0
  %476 = vmatpush1.msra.mxu0 0.0
  %477 = vmatprep.mubr.f32.mxu0 0.0
  %478 = vmatmul.mubr.f32.gmra.mrb[0].mxu0 %v408
  %v479 = vpop.f32.mrb[0].mxu0
  %v480 = vadd.f32 0.0, %v479
  %v481 = vpop.f32.mrb[0].mxu0
  %482 = vmatprep.mubr.f32.mxu0 0.0
  %483 = vmatmul.mubr.f32.gmra.mrb[0].mxu0 %v411
  %v484 = vpop.f32.mrb[0].mxu0
  %v485 = vadd.f32 0.0, %v484
  %v486 = vpop.f32.mrb[0].mxu0
  %487 = vdwg.mxu0
  %v488 = vmul.f32 %v480, %v15
  %v489 = vmul.f32 %v485, %v15
  %490 = vadd.xlane.f32.xlu0 %v488
  %v491 = vpop.xlane.xlu0 %490
  %492 = vadd.xlane.f32.xlu0 %v489
  %v493 = vpop.xlane.xlu0 %492
  %v494 = vmul.f32 %v488, %v480
  %v495 = vmul.f32 %v489, %v485
  %496 = vadd.xlane.f32.xlu0 %v494
  %v497 = vpop.xlane.xlu0 %496
  %498 = vadd.xlane.f32.xlu0 %v495
  %v499 = vpop.xlane.xlu0 %498
  %v500 = vmul.f32 %v491, 0.015625
  %v501 = vmul.f32 %v493, 0.015625
  %v502 = vmul.f32 %v497, 0.015625
  %v503 = vmul.f32 %v499, 0.015625
  %v504 = vmul.f32 %v500, %v500
  %v505 = vmul.f32 %v501, %v501
  %v506 = vsub.f32 %v502, %v504
  %v507 = vsub.f32 %v503, %v505
  %v508 = vmax.f32 %v506, 0.0
  %v509 = vmax.f32 %v507, 0.0
  %v510 = vsub.f32 %v480, %v500
  %v511 = vsub.f32 %v485, %v501
  %v512 = vadd.f32 %v508, 0.0001
  %v513 = vadd.f32 %v509, 0.0001
  %v514 = vrsqrt.pop %v512
  %v515 = vrsqrt.pop %v513
  %v516 = vmul.f32 %v510, %v514
  %v517 = vmul.f32 %v511, %v515
  %v518 = vmax.f32 %v516, 0.0
  %v519 = vmax.f32 %v517, 0.0
  %v520 = vld [vmem:[%s1 + $0x38] sm:$0xff]
  %v521 = vld [vmem:[%s1 + $0x40] sm:$0xff]
  %v523 = vsel %vm406, %v520, 0
  %v526 = vsel %vm406, %v521, 0
  %528 = vmatprep.subr.mxu0 0.0
  %529 = vmatpush1.msra.mxu0 %v518
  %530 = vmatprep.subr.mxu0 0.0
  %531 = vmatpush1.msra.mxu0 %v519
  %532 = vmatprep.subr.mxu0 0.0
  %533 = vmatpush1.msra.mxu0 0.0
  %534 = vmatprep.subr.mxu0 0.0
  %535 = vmatpush1.msra.mxu0 0.0
  %536 = vmatprep.subr.mxu0 0.0
  %537 = vmatpush1.msra.mxu0 0.0
  %538 = vmatprep.subr.mxu0 0.0
  %539 = vmatpush1.msra.mxu0 0.0
  %540 = vmatprep.subr.mxu0 0.0
  %541 = vmatpush1.msra.mxu0 0.0
  %542 = vmatprep.subr.mxu0 0.0
  %543 = vmatpush1.msra.mxu0 0.0
  %544 = vmatprep.subr.mxu0 0.0
  %545 = vmatpush1.msra.mxu0 0.0
  %546 = vmatprep.subr.mxu0 0.0
  %547 = vmatpush1.msra.mxu0 0.0
  %548 = vmatprep.subr.mxu0 0.0
  %549 = vmatpush1.msra.mxu0 0.0
  %550 = vmatprep.subr.mxu0 0.0
  %551 = vmatpush1.msra.mxu0 0.0
  %552 = vmatprep.subr.mxu0 0.0
  %553 = vmatpush1.msra.mxu0 0.0
  %554 = vmatprep.subr.mxu0 0.0
  %555 = vmatpush1.msra.mxu0 0.0
  %556 = vmatprep.subr.mxu0 0.0
  %557 = vmatpush1.msra.mxu0 0.0
  %558 = vmatprep.subr.mxu0 0.0
  %559 = vmatpush1.msra.mxu0 0.0
  %560 = vmatprep.subr.mxu0 0.0
  %561 = vmatpush1.msra.mxu0 0.0
  %562 = vmatprep.subr.mxu0 0.0
  %563 = vmatpush1.msra.mxu0 0.0
  %564 = vmatprep.subr.mxu0 0.0
  %565 = vmatpush1.msra.mxu0 0.0
  %566 = vmatprep.subr.mxu0 0.0
  %567 = vmatpush1.msra.mxu0 0.0
  %568 = vmatprep.subr.mxu0 0.0
  %569 = vmatpush1.msra.mxu0 0.0
  %570 = vmatprep.subr.mxu0 0.0
  %571 = vmatpush1.msra.mxu0 0.0
  %572 = vmatprep.subr.mxu0 0.0
  %573 = vmatpush1.msra.mxu0 0.0
  %574 = vmatprep.subr.mxu0 0.0
  %575 = vmatpush1.msra.mxu0 0.0
  %576 = vmatprep.subr.mxu0 0.0
  %577 = vmatpush1.msra.mxu0 0.0
  %578 = vmatprep.subr.mxu0 0.0
  %579 = vmatpush1.msra.mxu0 0.0
  %580 = vmatprep.subr.mxu0 0.0
  %581 = vmatpush1.msra.mxu0 0.0
  %582 = vmatprep.subr.mxu0 0.0
  %583 = vmatpush1.msra.mxu0 0.0
  %584 = vmatprep.subr.mxu0 0.0
  %585 = vmatpush1.msra.mxu0 0.0
  %586 = vmatprep.subr.mxu0 0.0
  %587 = vmatpush1.msra.mxu0 0.0
  %588 = vmatprep.subr.mxu0 0.0
  %589 = vmatpush1.msra.mxu0 0.0
  %590 = vmatprep.subr.mxu0 0.0
  %591 = vmatpush1.msra.mxu0 0.0
  %592 = vmatprep.mubr.f32.mxu0 0.0
  %593 = vmatmul.mubr.f32.gmra.mrb[0].mxu0 %v523
  %v594 = vpop.f32.mrb[0].mxu0
  %v595 = vadd.f32 0.0, %v594
  %v596 = vpop.f32.mrb[0].mxu0
  %597 = vmatprep.mubr.f32.mxu0 0.0
  %598 = vmatmul.mubr.f32.gmra.mrb[0].mxu0 %v526
  %v599 = vpop.f32.mrb[0].mxu0
  %v600 = vadd.f32 0.0, %v599
  %v601 = vpop.f32.mrb[0].mxu0
  %602 = vdwg.mxu0
  %v603 = vmul.f32 %v595, %v15
  %v604 = vmul.f32 %v600, %v15
  %605 = vadd.xlane.f32.xlu0 %v603
  %v606 = vpop.xlane.xlu0 %605
  %607 = vadd.xlane.f32.xlu0 %v604
  %v608 = vpop.xlane.xlu0 %607
  %v609 = vmul.f32 %v603, %v595
  %v610 = vmul.f32 %v604, %v600
  %611 = vadd.xlane.f32.xlu0 %v609
  %v612 = vpop.xlane.xlu0 %611
  %613 = vadd.xlane.f32.xlu0 %v610
  %v614 = vpop.xlane.xlu0 %613
  %v615 = vmul.f32 %v606, 0.015625
  %v616 = vmul.f32 %v608, 0.015625
  %v617 = vmul.f32 %v612, 0.015625
  %v618 = vmul.f32 %v614, 0.015625
  %v619 = vmul.f32 %v615, %v615
  %v620 = vmul.f32 %v616, %v616
  %v621 = vsub.f32 %v617, %v619
  %v622 = vsub.f32 %v618, %v620
  %v623 = vmax.f32 %v621, 0.0
  %v624 = vmax.f32 %v622, 0.0
  %v625 = vsub.f32 %v595, %v615
  %v626 = vsub.f32 %v600, %v616
  %v627 = vadd.f32 %v623, 0.0001
  %v628 = vadd.f32 %v624, 0.0001
  %v629 = vrsqrt.pop %v627
  %v630 = vrsqrt.pop %v628
  %v631 = vmul.f32 %v625, %v629
  %v632 = vmul.f32 %v626, %v630
  %v633 = vadd.f32 %v631, %v402
  %v634 = vadd.f32 %v632, %v403
  %v635 = vmax.f32 %v633, 0.0
  %v636 = vmax.f32 %v634, 0.0
  %v637 = vld [vmem:[%s1 + $0x48] sm:$0xff]
  %v639 = vsel %vm406, %v637, 0
  %641 = vmatprep.subr.mxu0 0.0
  %642 = vmatpush1.msra.mxu0 %v635
  %643 = vmatprep.subr.mxu0 0.0
  %644 = vmatpush1.msra.mxu0 %v636
  %645 = vmatprep.subr.mxu0 0.0
  %646 = vmatpush1.msra.mxu0 0.0
  %647 = vmatprep.subr.mxu0 0.0
  %648 = vmatpush1.msra.mxu0 0.0
  %649 = vmatprep.subr.mxu0 0.0
  %650 = vmatpush1.msra.mxu0 0.0
  %651 = vmatprep.subr.mxu0 0.0
  %652 = vmatpush1.msra.mxu0 0.0
  %653 = vmatprep.subr.mxu0 0.0
  %654 = vmatpush1.msra.mxu0 0.0
  %655 = vmatprep.subr.mxu0 0.0
  %656 = vmatpush1.msra.mxu0 0.0
  %657 = vmatprep.subr.mxu0 0.0
  %658 = vmatpush1.msra.mxu0 0.0
  %659 = vmatprep.subr.mxu0 0.0
  %660 = vmatpush1.msra.mxu0 0.0
  %661 = vmatprep.subr.mxu0 0.0
  %662 = vmatpush1.msra.mxu0 0.0
  %663 = vmatprep.subr.mxu0 0.0
  %664 = vmatpush1.msra.mxu0 0.0
  %665 = vmatprep.subr.mxu0 0.0
  %666 = vmatpush1.msra.mxu0 0.0
  %667 = vmatprep.subr.mxu0 0.0
  %668 = vmatpush1.msra.mxu0 0.0
  %669 = vmatprep.subr.mxu0 0.0
  %670 = vmatpush1.msra.mxu0 0.0
  %671 = vmatprep.subr.mxu0 0.0
  %672 = vmatpush1.msra.mxu0 0.0
  %673 = vmatprep.subr.mxu0 0.0
  %674 = vmatpush1.msra.mxu0 0.0
  %675 = vmatprep.subr.mxu0 0.0
  %676 = vmatpush1.msra.mxu0 0.0
  %677 = vmatprep.subr.mxu0 0.0
  %678 = vmatpush1.msra.mxu0 0.0
  %679 = vmatprep.subr.mxu0 0.0
  %680 = vmatpush1.msra.mxu0 0.0
  %681 = vmatprep.subr.mxu0 0.0
  %682 = vmatpush1.msra.mxu0 0.0
  %683 = vmatprep.subr.mxu0 0.0
  %684 = vmatpush1.msra.mxu0 0.0
  %685 = vmatprep.subr.mxu0 0.0
  %686 = vmatpush1.msra.mxu0 0.0
  %687 = vmatprep.subr.mxu0 0.0
  %688 = vmatpush1.msra.mxu0 0.0
  %689 = vmatprep.subr.mxu0 0.0
  %690 = vmatpush1.msra.mxu0 0.0
  %691 = vmatprep.subr.mxu0 0.0
  %692 = vmatpush1.msra.mxu0 0.0
  %693 = vmatprep.subr.mxu0 0.0
  %694 = vmatpush1.msra.mxu0 0.0
  %695 = vmatprep.subr.mxu0 0.0
  %696 = vmatpush1.msra.mxu0 0.0
  %697 = vmatprep.subr.mxu0 0.0
  %698 = vmatpush1.msra.mxu0 0.0
  %699 = vmatprep.subr.mxu0 0.0
  %700 = vmatpush1.msra.mxu0 0.0
  %701 = vmatprep.subr.mxu0 0.0
  %702 = vmatpush1.msra.mxu0 0.0
  %703 = vmatprep.subr.mxu0 0.0
  %704 = vmatpush1.msra.mxu0 0.0
  %705 = vmatprep.mubr.f32.mxu0 0.0
  %706 = vmatmul.mubr.f32.gmra.mrb[0].mxu0 %v639
  %v707 = vpop.f32.mrb[0].mxu0
  %v708 = vadd.f32 0.0, %v707
  %v709 = vpop.f32.mrb[0].mxu0
  %710 = vdwg.mxu0
  %v711 = vmul.f32 %v708, %v15
  %712 = vadd.xlane.f32.xlu0 %v711
  %v713 = vpop.xlane.xlu0 %712
  %v714 = vmul.f32 %v711, %v708
  %715 = vadd.xlane.f32.xlu0 %v714
  %v716 = vpop.xlane.xlu0 %715
  %v717 = vmul.f32 %v713, 0.015625
  %v718 = vmul.f32 %v716, 0.015625
  %v719 = vmul.f32 %v717, %v717
  %v720 = vsub.f32 %v718, %v719
  %v721 = vmax.f32 %v720, 0.0
  %v722 = vsub.f32 %v708, %v717
  %v723 = vadd.f32 %v721, 0.0001
  %v724 = vrsqrt.pop %v723
  %v725 = vmul.f32 %v722, %v724
  %v726 = vmax.f32 %v725, 0.0
  %v727 = vld [vmem:[%s1 + $0x50] sm:$0xff]
  %v729 = vsel %vm406, %v727, 0
  %731 = vmatprep.subr.mxu0 0.0
  %732 = vmatpush1.msra.mxu0 %v288
  %733 = vmatprep.subr.mxu0 0.0
  %734 = vmatpush1.msra.mxu0 %v726
  %735 = vmatprep.subr.mxu0 0.0
  %736 = vmatpush1.msra.mxu0 0.0
  %737 = vmatprep.subr.mxu0 0.0
  %738 = vmatpush1.msra.mxu0 0.0
  %739 = vmatprep.subr.mxu0 0.0
  %740 = vmatpush1.msra.mxu0 0.0
  %741 = vmatprep.subr.mxu0 0.0
  %742 = vmatpush1.msra.mxu0 0.0
  %743 = vmatprep.subr.mxu0 0.0
  %744 = vmatpush1.msra.mxu0 0.0
  %745 = vmatprep.subr.mxu0 0.0
  %746 = vmatpush1.msra.mxu0 0.0
  %747 = vmatprep.subr.mxu0 0.0
  %748 = vmatpush1.msra.mxu0 0.0
  %749 = vmatprep.subr.mxu0 0.0
  %750 = vmatpush1.msra.mxu0 0.0
  %751 = vmatprep.subr.mxu0 0.0
  %752 = vmatpush1.msra.mxu0 0.0
  %753 = vmatprep.subr.mxu0 0.0
  %754 = vmatpush1.msra.mxu0 0.0
  %755 = vmatprep.subr.mxu0 0.0
  %756 = vmatpush1.msra.mxu0 0.0
  %757 = vmatprep.subr.mxu0 0.0
  %758 = vmatpush1.msra.mxu0 0.0
  %759 = vmatprep.subr.mxu0 0.0
  %760 = vmatpush1.msra.mxu0 0.0
  %761 = vmatprep.subr.mxu0 0.0
  %762 = vmatpush1.msra.mxu0 0.0
  %763 = vmatprep.subr.mxu0 0.0
  %764 = vmatpush1.msra.mxu0 0.0
  %765 = vmatprep.subr.mxu0 0.0
  %766 = vmatpush1.msra.mxu0 0.0
  %767 = vmatprep.subr.mxu0 0.0
  %768 = vmatpush1.msra.mxu0 0.0
  %769 = vmatprep.subr.mxu0 0.0
  %770 = vmatpush1.msra.mxu0 0.0
  %771 = vmatprep.subr.mxu0 0.0
  %772 = vmatpush1.msra.mxu0 0.0
  %773 = vmatprep.subr.mxu0 0.0
  %774 = vmatpush1.msra.mxu0 0.0
  %775 = vmatprep.subr.mxu0 0.0
  %776 = vmatpush1.msra.mxu0 0.0
  %777 = vmatprep.subr.mxu0 0.0
  %778 = vmatpush1.msra.mxu0 0.0
  %779 = vmatprep.subr.mxu0 0.0
  %780 = vmatpush1.msra.mxu0 0.0
  %781 = vmatprep.subr.mxu0 0.0
  %782 = vmatpush1.msra.mxu0 0.0
  %783 = vmatprep.subr.mxu0 0.0
  %784 = vmatpush1.msra.mxu0 0.0
  %785 = vmatprep.subr.mxu0 0.0
  %786 = vmatpush1.msra.mxu0 0.0
  %787 = vmatprep.subr.mxu0 0.0
  %788 = vmatpush1.msra.mxu0 0.0
  %789 = vmatprep.subr.mxu0 0.0
  %790 = vmatpush1.msra.mxu0 0.0
  %791 = vmatprep.subr.mxu0 0.0
  %792 = vmatpush1.msra.mxu0 0.0
  %793 = vmatprep.subr.mxu0 0.0
  %794 = vmatpush1.msra.mxu0 0.0
  %795 = vmatprep.mubr.f32.mxu0 0.0
  %796 = vmatmul.mubr.f32.gmra.mrb[0].mxu0 %v729
  %v797 = vpop.f32.mrb[0].mxu0
  %v798 = vadd.f32 0.0, %v797
  %v799 = vpop.f32.mrb[0].mxu0
  %800 = vdwg.mxu0
  %v801 = vmul.f32 %v798, %v15
  %802 = vadd.xlane.f32.xlu0 %v801
  %v803 = vpop.xlane.xlu0 %802
  %v804 = vmul.f32 %v801, %v798
  %805 = vadd.xlane.f32.xlu0 %v804
  %v806 = vpop.xlane.xlu0 %805
  %v807 = vmul.f32 %v803, 0.015625
  %v808 = vmul.f32 %v806, 0.015625
  %v809 = vmul.f32 %v807, %v807
  %v810 = vsub.f32 %v808, %v809
  %v811 = vmax.f32 %v810, 0.0
  %v812 = vsub.f32 %v798, %v807
  %v813 = vadd.f32 %v811, 0.0001
  %v814 = vrsqrt.pop %v813
  %v815 = vmul.f32 %v812, %v814
  %v816 = vld [vmem:[%s1 + $0x58] sm:$0xff]
  %v818 = vsel %vm406, %v816, 0
  %820 = vmatprep.subr.mxu0 0.0
  %821 = vmatpush1.msra.mxu0 %v288
  %822 = vmatprep.subr.mxu0 0.0
  %823 = vmatpush1.msra.mxu0 %v726
  %824 = vmatprep.subr.mxu0 0.0
  %825 = vmatpush1.msra.mxu0 0.0
  %826 = vmatprep.subr.mxu0 0.0
  %827 = vmatpush1.msra.mxu0 0.0
  %828 = vmatprep.subr.mxu0 0.0
  %829 = vmatpush1.msra.mxu0 0.0
  %830 = vmatprep.subr.mxu0 0.0
  %831 = vmatpush1.msra.mxu0 0.0
  %832 = vmatprep.subr.mxu0 0.0
  %833 = vmatpush1.msra.mxu0 0.0
  %834 = vmatprep.subr.mxu0 0.0
  %835 = vmatpush1.msra.mxu0 0.0
  %836 = vmatprep.subr.mxu0 0.0
  %837 = vmatpush1.msra.mxu0 0.0
  %838 = vmatprep.subr.mxu0 0.0
  %839 = vmatpush1.msra.mxu0 0.0
  %840 = vmatprep.subr.mxu0 0.0
  %841 = vmatpush1.msra.mxu0 0.0
  %842 = vmatprep.subr.mxu0 0.0
  %843 = vmatpush1.msra.mxu0 0.0
  %844 = vmatprep.subr.mxu0 0.0
  %845 = vmatpush1.msra.mxu0 0.0
  %846 = vmatprep.subr.mxu0 0.0
  %847 = vmatpush1.msra.mxu0 0.0
  %848 = vmatprep.subr.mxu0 0.0
  %849 = vmatpush1.msra.mxu0 0.0
  %850 = vmatprep.subr.mxu0 0.0
  %851 = vmatpush1.msra.mxu0 0.0
  %852 = vmatprep.subr.mxu0 0.0
  %853 = vmatpush1.msra.mxu0 0.0
  %854 = vmatprep.subr.mxu0 0.0
  %855 = vmatpush1.msra.mxu0 0.0
  %856 = vmatprep.subr.mxu0 0.0
  %857 = vmatpush1.msra.mxu0 0.0
  %858 = vmatprep.subr.mxu0 0.0
  %859 = vmatpush1.msra.mxu0 0.0
  %860 = vmatprep.subr.mxu0 0.0
  %861 = vmatpush1.msra.mxu0 0.0
  %862 = vmatprep.subr.mxu0 0.0
  %863 = vmatpush1.msra.mxu0 0.0
  %864 = vmatprep.subr.mxu0 0.0
  %865 = vmatpush1.msra.mxu0 0.0
  %866 = vmatprep.subr.mxu0 0.0
  %867 = vmatpush1.msra.mxu0 0.0
  %868 = vmatprep.subr.mxu0 0.0
  %869 = vmatpush1.msra.mxu0 0.0
  %870 = vmatprep.subr.mxu0 0.0
  %871 = vmatpush1.msra.mxu0 0.0
  %872 = vmatprep.subr.mxu0 0.0
  %873 = vmatpush1.msra.mxu0 0.0
  %874 = vmatprep.subr.mxu0 0.0
  %875 = vmatpush1.msra.mxu0 0.0
  %876 = vmatprep.subr.mxu0 0.0
  %877 = vmatpush1.msra.mxu0 0.0
  %878 = vmatprep.subr.mxu0 0.0
  %879 = vmatpush1.msra.mxu0 0.0
  %880 = vmatprep.subr.mxu0 0.0
  %881 = vmatpush1.msra.mxu0 0.0
  %882 = vmatprep.subr.mxu0 0.0
  %883 = vmatpush1.msra.mxu0 0.0
  %884 = vmatprep.mubr.f32.mxu0 0.0
  %885 = vmatmul.mubr.f32.gmra.mrb[0].mxu0 %v818
  %v886 = vpop.f32.mrb[0].mxu0
  %v887 = vadd.f32 0.0, %v886
  %v888 = vpop.f32.mrb[0].mxu0
  %889 = vdwg.mxu0
  %v890 = vmul.f32 %v887, %v15
  %891 = vadd.xlane.f32.xlu0 %v890
  %v892 = vpop.xlane.xlu0 %891
  %v893 = vmul.f32 %v890, %v887
  %894 = vadd.xlane.f32.xlu0 %v893
  %v895 = vpop.xlane.xlu0 %894
  %v896 = vmul.f32 %v892, 0.015625
  %v897 = vmul.f32 %v895, 0.015625
  %v898 = vmul.f32 %v896, %v896
  %v899 = vsub.f32 %v897, %v898
  %v900 = vmax.f32 %v899, 0.0
  %v901 = vsub.f32 %v887, %v896
  %v902 = vadd.f32 %v900, 0.0001
  %v903 = vrsqrt.pop %v902
  %v904 = vmul.f32 %v901, %v903
  %v905 = vmax.f32 %v904, 0.0
  %v906 = vld [vmem:[%s1 + $0x60] sm:$0xff]
  %v908 = vsel %vm18, %v906, 0
  %910 = vmatprep.subr.mxu0 0.0
  %911 = vmatpush1.msra.mxu0 %v905
  %912 = vmatprep.subr.mxu0 0.0
  %913 = vmatpush1.msra.mxu0 0.0
  %914 = vmatprep.subr.mxu0 0.0
  %915 = vmatpush1.msra.mxu0 0.0
  %916 = vmatprep.subr.mxu0 0.0
  %917 = vmatpush1.msra.mxu0 0.0
  %918 = vmatprep.subr.mxu0 0.0
  %919 = vmatpush1.msra.mxu0 0.0
  %920 = vmatprep.subr.mxu0 0.0
  %921 = vmatpush1.msra.mxu0 0.0
  %922 = vmatprep.subr.mxu0 0.0
  %923 = vmatpush1.msra.mxu0 0.0
  %924 = vmatprep.subr.mxu0 0.0
  %925 = vmatpush1.msra.mxu0 0.0
  %926 = vmatprep.subr.mxu0 0.0
  %927 = vmatpush1.msra.mxu0 0.0
  %928 = vmatprep.subr.mxu0 0.0
  %929 = vmatpush1.msra.mxu0 0.0
  %930 = vmatprep.subr.mxu0 0.0
  %931 = vmatpush1.msra.mxu0 0.0
  %932 = vmatprep.subr.mxu0 0.0
  %933 = vmatpush1.msra.mxu0 0.0
  %934 = vmatprep.subr.mxu0 0.0
  %935 = vmatpush1.msra.mxu0 0.0
  %936 = vmatprep.subr.mxu0 0.0
  %937 = vmatpush1.msra.mxu0 0.0
  %938 = vmatprep.subr.mxu0 0.0
  %939 = vmatpush1.msra.mxu0 0.0
  %940 = vmatprep.subr.mxu0 0.0
  %941 = vmatpush1.msra.mxu0 0.0
  %942 = vmatprep.subr.mxu0 0.0
  %943 = vmatpush1.msra.mxu0 0.0
  %944 = vmatprep.subr.mxu0 0.0
  %945 = vmatpush1.msra.mxu0 0.0
  %946 = vmatprep.subr.mxu0 0.0
  %947 = vmatpush1.msra.mxu0 0.0
  %948 = vmatprep.subr.mxu0 0.0
  %949 = vmatpush1.msra.mxu0 0.0
  %950 = vmatprep.subr.mxu0 0.0
  %951 = vmatpush1.msra.mxu0 0.0
  %952 = vmatprep.subr.mxu0 0.0
  %953 = vmatpush1.msra.mxu0 0.0
  %954 = vmatprep.subr.mxu0 0.0
  %955 = vmatpush1.msra.mxu0 0.0
  %956 = vmatprep.subr.mxu0 0.0
  %957 = vmatpush1.msra.mxu0 0.0
  %958 = vmatprep.subr.mxu0 0.0
  %959 = vmatpush1.msra.mxu0 0.0
  %960 = vmatprep.subr.mxu0 0.0
  %961 = vmatpush1.msra.mxu0 0.0
  %962 = vmatprep.subr.mxu0 0.0
  %963 = vmatpush1.msra.mxu0 0.0
  %964 = vmatprep.subr.mxu0 0.0
  %965 = vmatpush1.msra.mxu0 0.0
  %966 = vmatprep.subr.mxu0 0.0
  %967 = vmatpush1.msra.mxu0 0.0
  %968 = vmatprep.subr.mxu0 0.0
  %969 = vmatpush1.msra.mxu0 0.0
  %970 = vmatprep.subr.mxu0 0.0
  %971 = vmatpush1.msra.mxu0 0.0
  %972 = vmatprep.subr.mxu0 0.0
  %973 = vmatpush1.msra.mxu0 0.0
  %974 = vmatprep.mubr.f32.mxu0 0.0
  %975 = vmatmul.mubr.f32.gmra.mrb[0].mxu0 %v908
  %v976 = vpop.f32.mrb[0].mxu0
  %v977 = vadd.f32 0.0, %v976
  %v978 = vpop.f32.mrb[0].mxu0
  %979 = vdwg.mxu0
  %v980 = vmul.f32 %v977, %v15
  %981 = vadd.xlane.f32.xlu0 %v980
  %v982 = vpop.xlane.xlu0 %981
  %v983 = vmul.f32 %v980, %v977
  %984 = vadd.xlane.f32.xlu0 %v983
  %v985 = vpop.xlane.xlu0 %984
  %v986 = vmul.f32 %v982, 0.015625
  %v987 = vmul.f32 %v985, 0.015625
  %v988 = vmul.f32 %v986, %v986
  %v989 = vsub.f32 %v987, %v988
  %v990 = vmax.f32 %v989, 0.0
  %v991 = vsub.f32 %v977, %v986
  %v992 = vadd.f32 %v990, 0.0001
  %v993 = vrsqrt.pop %v992
  %v994 = vmul.f32 %v991, %v993
  %v995 = vadd.f32 %v994, %v815
  %v996 = vmax.f32 %v995, 0.0
  %v997 = vld [vmem:[%s1 + $0x68] sm:$0xff]
  %v998 = vld [vmem:[%s1 + $0x70] sm:$0xff]
  %v999 = vld [vmem:[%s1 + $0x78] sm:$0xff]
  %v1001 = vsel %vm18, %v997, 0
  %v1004 = vsel %vm18, %v998, 0
  %v1007 = vsel %vm18, %v999, 0
  %1009 = vmatprep.subr.mxu0 0.0
  %1010 = vmatpush1.msra.mxu0 %v996
  %1011 = vmatprep.subr.mxu0 0.0
  %1012 = vmatpush1.msra.mxu0 0.0
  %1013 = vmatprep.subr.mxu0 0.0
  %1014 = vmatpush1.msra.mxu0 0.0
  %1015 = vmatprep.subr.mxu0 0.0
  %1016 = vmatpush1.msra.mxu0 0.0
  %1017 = vmatprep.subr.mxu0 0.0
  %1018 = vmatpush1.msra.mxu0 0.0
  %1019 = vmatprep.subr.mxu0 0.0
  %1020 = vmatpush1.msra.mxu0 0.0
  %1021 = vmatprep.subr.mxu0 0.0
  %1022 = vmatpush1.msra.mxu0 0.0
  %1023 = vmatprep.subr.mxu0 0.0
  %1024 = vmatpush1.msra.mxu0 0.0
  %1025 = vmatprep.subr.mxu0 0.0
  %1026 = vmatpush1.msra.mxu0 0.0
  %1027 = vmatprep.subr.mxu0 0.0
  %1028 = vmatpush1.msra.mxu0 0.0
  %1029 = vmatprep.subr.mxu0 0.0
  %1030 = vmatpush1.msra.mxu0 0.0
  %1031 = vmatprep.subr.mxu0 0.0
  %1032 = vmatpush1.msra.mxu0 0.0
  %1033 = vmatprep.subr.mxu0 0.0
  %1034 = vmatpush1.msra.mxu0 0.0
  %1035 = vmatprep.subr.mxu0 0.0
  %1036 = vmatpush1.msra.mxu0 0.0
  %1037 = vmatprep.subr.mxu0 0.0
  %1038 = vmatpush1.msra.mxu0 0.0
  %1039 = vmatprep.subr.mxu0 0.0
  %1040 = vmatpush1.msra.mxu0 0.0
  %1041 = vmatprep.subr.mxu0 0.0
  %1042 = vmatpush1.msra.mxu0 0.0
  %1043 = vmatprep.subr.mxu0 0.0
  %1044 = vmatpush1.msra.mxu0 0.0
  %1045 = vmatprep.subr.mxu0 0.0
  %1046 = vmatpush1.msra.mxu0 0.0
  %1047 = vmatprep.subr.mxu0 0.0
  %1048 = vmatpush1.msra.mxu0 0.0
  %1049 = vmatprep.subr.mxu0 0.0
  %1050 = vmatpush1.msra.mxu0 0.0
  %1051 = vmatprep.subr.mxu0 0.0
  %1052 = vmatpush1.msra.mxu0 0.0
  %1053 = vmatprep.subr.mxu0 0.0
  %1054 = vmatpush1.msra.mxu0 0.0
  %1055 = vmatprep.subr.mxu0 0.0
  %1056 = vmatpush1.msra.mxu0 0.0
  %1057 = vmatprep.subr.mxu0 0.0
  %1058 = vmatpush1.msra.mxu0 0.0
  %1059 = vmatprep.subr.mxu0 0.0
  %1060 = vmatpush1.msra.mxu0 0.0
  %1061 = vmatprep.subr.mxu0 0.0
  %1062 = vmatpush1.msra.mxu0 0.0
  %1063 = vmatprep.subr.mxu0 0.0
  %1064 = vmatpush1.msra.mxu0 0.0
  %1065 = vmatprep.subr.mxu0 0.0
  %1066 = vmatpush1.msra.mxu0 0.0
  %1067 = vmatprep.subr.mxu0 0.0
  %1068 = vmatpush1.msra.mxu0 0.0
  %1069 = vmatprep.subr.mxu0 0.0
  %1070 = vmatpush1.msra.mxu0 0.0
  %1071 = vmatprep.subr.mxu0 0.0
  %1072 = vmatpush1.msra.mxu0 0.0
  %1073 = vmatprep.mubr.f32.mxu0 0.0
  %1074 = vmatmul.mubr.f32.gmra.mrb[0].mxu0 %v1001
  %v1075 = vpop.f32.mrb[0].mxu0
  %v1076 = vadd.f32 0.0, %v1075
  %v1077 = vpop.f32.mrb[0].mxu0
  %1078 = vmatprep.mubr.f32.mxu0 0.0
  %1079 = vmatmul.mubr.f32.gmra.mrb[0].mxu0 %v1004
  %v1080 = vpop.f32.mrb[0].mxu0
  %v1081 = vadd.f32 0.0, %v1080
  %v1082 = vpop.f32.mrb[0].mxu0
  %1083 = vmatprep.mubr.f32.mxu0 0.0
  %1084 = vmatmul.mubr.f32.gmra.mrb[0].mxu0 %v1007
  %v1085 = vpop.f32.mrb[0].mxu0
  %v1086 = vadd.f32 0.0, %v1085
  %v1087 = vpop.f32.mrb[0].mxu0
  %1088 = vdwg.mxu0
  %v1089 = vmul.f32 %v1076, %v15
  %v1090 = vmul.f32 %v1081, %v15
  %v1091 = vmul.f32 %v1086, %v15
  %1092 = vadd.xlane.f32.xlu0 %v1089
  %v1093 = vpop.xlane.xlu0 %1092
  %1094 = vadd.xlane.f32.xlu0 %v1090
  %v1095 = vpop.xlane.xlu0 %1094
  %1096 = vadd.xlane.f32.xlu0 %v1091
  %v1097 = vpop.xlane.xlu0 %1096
  %v1098 = vmul.f32 %v1089, %v1076
  %v1099 = vmul.f32 %v1090, %v1081
  %v1100 = vmul.f32 %v1091, %v1086
  %1101 = vadd.xlane.f32.xlu0 %v1098
  %v1102 = vpop.xlane.xlu0 %1101
  %1103 = vadd.xlane.f32.xlu0 %v1099
  %v1104 = vpop.xlane.xlu0 %1103
  %1105 = vadd.xlane.f32.xlu0 %v1100
  %v1106 = vpop.xlane.xlu0 %1105
  %v1107 = vmul.f32 %v1093, 0.015625
  %v1108 = vmul.f32 %v1095, 0.015625
  %v1109 = vmul.f32 %v1097, 0.015625
  %v1110 = vmul.f32 %v1102, 0.015625
  %v1111 = vmul.f32 %v1104, 0.015625
  %v1112 = vmul.f32 %v1106, 0.015625
  %v1113 = vmul.f32 %v1107, %v1107
  %v1114 = vmul.f32 %v1108, %v1108
  %v1115 = vmul.f32 %v1109, %v1109
  %v1116 = vsub.f32 %v1110, %v1113
  %v1117 = vsub.f32 %v1111, %v1114
  %v1118 = vsub.f32 %v1112, %v1115
  %v1119 = vmax.f32 %v1116, 0.0
  %v1120 = vmax.f32 %v1117, 0.0
  %v1121 = vmax.f32 %v1118, 0.0
  %v1122 = vsub.f32 %v1076, %v1107
  %v1123 = vsub.f32 %v1081, %v1108
  %v1124 = vsub.f32 %v1086, %v1109
  %v1125 = vadd.f32 %v1119, 0.0001
  %v1126 = vadd.f32 %v1120, 0.0001
  %v1127 = vadd.f32 %v1121, 0.0001
  %v1128 = vrsqrt.pop %v1125
  %v1129 = vrsqrt.pop %v1126
  %v1130 = vrsqrt.pop %v1127
  %v1131 = vmul.f32 %v1122, %v1128
  %v1132 = vmul.f32 %v1123, %v1129
  %v1133 = vmul.f32 %v1124, %v1130
  %v1134 = vmax.f32 %v1131, 0.0
  %v1135 = vmax.f32 %v1132, 0.0
  %v1136 = vmax.f32 %v1133, 0.0
  %v1137 = vld [vmem:[%s1 + $0x80] sm:$0xff]
  %vm1138 = vcmask 195584
  %v1140 = vsel %vm1138, %v1137, 0
  %1142 = vmatprep.subr.mxu0 0.0
  %1143 = vmatpush1.msra.mxu0 %v1134
  %1144 = vmatprep.subr.mxu0 0.0
  %1145 = vmatpush1.msra.mxu0 %v1135
  %1146 = vmatprep.subr.mxu0 0.0
  %1147 = vmatpush1.msra.mxu0 %v1136
  %1148 = vmatprep.subr.mxu0 0.0
  %1149 = vmatpush1.msra.mxu0 0.0
  %1150 = vmatprep.subr.mxu0 0.0
  %1151 = vmatpush1.msra.mxu0 0.0
  %1152 = vmatprep.subr.mxu0 0.0
  %1153 = vmatpush1.msra.mxu0 0.0
  %1154 = vmatprep.subr.mxu0 0.0
  %1155 = vmatpush1.msra.mxu0 0.0
  %1156 = vmatprep.subr.mxu0 0.0
  %1157 = vmatpush1.msra.mxu0 0.0
  %1158 = vmatprep.subr.mxu0 0.0
  %1159 = vmatpush1.msra.mxu0 0.0
  %1160 = vmatprep.subr.mxu0 0.0
  %1161 = vmatpush1.msra.mxu0 0.0
  %1162 = vmatprep.subr.mxu0 0.0
  %1163 = vmatpush1.msra.mxu0 0.0
  %1164 = vmatprep.subr.mxu0 0.0
  %1165 = vmatpush1.msra.mxu0 0.0
  %1166 = vmatprep.subr.mxu0 0.0
  %1167 = vmatpush1.msra.mxu0 0.0
  %1168 = vmatprep.subr.mxu0 0.0
  %1169 = vmatpush1.msra.mxu0 0.0
  %1170 = vmatprep.subr.mxu0 0.0
  %1171 = vmatpush1.msra.mxu0 0.0
  %1172 = vmatprep.subr.mxu0 0.0
  %1173 = vmatpush1.msra.mxu0 0.0
  %1174 = vmatprep.subr.mxu0 0.0
  %1175 = vmatpush1.msra.mxu0 0.0
  %1176 = vmatprep.subr.mxu0 0.0
  %1177 = vmatpush1.msra.mxu0 0.0
  %1178 = vmatprep.subr.mxu0 0.0
  %1179 = vmatpush1.msra.mxu0 0.0
  %1180 = vmatprep.subr.mxu0 0.0
  %1181 = vmatpush1.msra.mxu0 0.0
  %1182 = vmatprep.subr.mxu0 0.0
  %1183 = vmatpush1.msra.mxu0 0.0
  %1184 = vmatprep.subr.mxu0 0.0
  %1185 = vmatpush1.msra.mxu0 0.0
  %1186 = vmatprep.subr.mxu0 0.0
  %1187 = vmatpush1.msra.mxu0 0.0
  %1188 = vmatprep.subr.mxu0 0.0
  %1189 = vmatpush1.msra.mxu0 0.0
  %1190 = vmatprep.subr.mxu0 0.0
  %1191 = vmatpush1.msra.mxu0 0.0
  %1192 = vmatprep.subr.mxu0 0.0
  %1193 = vmatpush1.msra.mxu0 0.0
  %1194 = vmatprep.subr.mxu0 0.0
  %1195 = vmatpush1.msra.mxu0 0.0
  %1196 = vmatprep.subr.mxu0 0.0
  %1197 = vmatpush1.msra.mxu0 0.0
  %1198 = vmatprep.subr.mxu0 0.0
  %1199 = vmatpush1.msra.mxu0 0.0
  %1200 = vmatprep.subr.mxu0 0.0
  %1201 = vmatpush1.msra.mxu0 0.0
  %1202 = vmatprep.subr.mxu0 0.0
  %1203 = vmatpush1.msra.mxu0 0.0
  %1204 = vmatprep.subr.mxu0 0.0
  %1205 = vmatpush1.msra.mxu0 0.0
  %1206 = vmatprep.mubr.f32.mxu0 0.0
  %1207 = vmatmul.mubr.f32.gmra.mrb[0].mxu0 %v1140
  %v1208 = vpop.f32.mrb[0].mxu0
  %v1209 = vadd.f32 0.0, %v1208
  %v1210 = vpop.f32.mrb[0].mxu0
  %1211 = vdwg.mxu0
  %v1212 = vlaneseq
  %v1213 = vshrl.u32 %v1212, 7
  %vm1214 = vcmp.ge.s32.totalorder %v1213, 1
  %vm1215 = vcmp.lt.s32.totalorder %v1213, 4
  %vm1216 = vmand %vm1214, %vm1215
  %v1217 = vsel %vm1216, 1, 0
  %v1218 = vcvt.s32.f32 %v1217
  %v1219 = vmul.f32 %v1209, %v1209
  %v1220 = vmul.f32 %v1219, %v1218
  %v1221 = vrot.slane %v1220, 4
  %v1222 = vadd.f32 %v1220, %v1221
  %v1223 = vrot.slane %v1222, 2
  %v1224 = vadd.f32 %v1222, %v1223
  %v1225 = vrot.slane %v1224, 1
  %v1226 = vadd.f32 %v1224, %v1225
  %v1227 = vmax.f32 %v1226, 1e-24
  %v1228 = vrsqrt.pop %v1227
  %v1229 = vmul.f32 %v1218, %v1228
  %v1230 = vsub.f32 1.0, %v1218
  %v1231 = vadd.f32 %v1229, %v1230
  %v1232 = vmul.f32 %v1209, %v1231
  %1233 = vst [vmem:[%s2] sm:$0xff] %v1232
  // Predicated region
  $region10: #{smart_tree_forward.1} parent=0 // pred_check
    _
  $region11: #{smart_tree_forward.1} parent=0 // pred_check_branch
    %1235 = sbr.rel (0) target = $region13
  $region12: #{smart_tree_forward.1} parent=0 // pred_region
    _
  $region13: #{smart_tree_forward.1} parent=0 // pred_fallthru
    _
  // Predicated region
  $region14: #{smart_tree_forward.1} parent=0 // pred_check
    _
  $region15: #{smart_tree_forward.1} parent=0 // pred_check_branch
    %1237 = sbr.rel (0) target = $region17
  $region16: #{smart_tree_forward.1} parent=0 // pred_region
    _
  $region17: #{smart_tree_forward.1} parent=0 // pred_fallthru
    _

</llo_original>
